<compile_context>
chip_gen: v7x
topology: tpu7x:2x2x1
jax: 0.10.0
libtpu: 0.0.40
codegen_flags: <defaults>
</compile_context>

<pallas_src>
import jax
import jax.numpy as jnp
import numpy as np
from jax import lax
from jax.experimental import pallas as pl
from jax.experimental.pallas import tpu as pltpu

N_LAYERS = 2
BN_EPS = 1e-5


def _round_up(a, m):
    return ((a + m - 1) // m) * m


def gin_kernel(x_ref, p_ref, g_ref, s_ref, ea_ref,
               nw_ref, nb_ref, ew_ref, eb_ref,
               w1_ref, b1_ref, w2_ref, b2_ref,
               pooled_ref, h_scr, agg_scr):
    f32, bf16 = jnp.float32, jnp.bfloat16
    layer = pl.program_id(0)
    k = pl.program_id(1)
    n_layers = pl.num_programs(0)
    n_k = pl.num_programs(1)

    # ---- node encoder: h = x @ Wn + bn (only at the very first grid step) ----
    @pl.when(jnp.logical_and(layer == 0, k == 0))
    def _():
        h_scr[...] = (jnp.dot(x_ref[...].astype(bf16), nw_ref[...],
                              preferred_element_type=f32) + nb_ref[...])

    # ---- reset the scatter accumulator at the start of every layer ----
    @pl.when(k == 0)
    def _():
        agg_scr[...] = jnp.zeros_like(agg_scr)

    # ---- message passing for this edge tile (bf16 MXU, f32 accumulation) ----
    h16 = h_scr[...].astype(bf16)                                        # [N, H]
    x_j = jnp.dot(g_ref[...], h16, preferred_element_type=f32)           # gather src rows
    ea = jnp.dot(ea_ref[...].astype(bf16), ew_ref[...],
                 preferred_element_type=f32) + eb_ref[...]               # edge encoder
    msg = jnp.maximum(x_j + ea, 0.0).astype(bf16)                        # GINE message
    # scatter-add over destination nodes; edge_atten is pre-folded into s_ref
    agg_scr[...] += jnp.dot(s_ref[...], msg, preferred_element_type=f32)

    # ---- end of layer: (1+eps)*h + agg -> MLP (BN folded) -> ReLU ----
    @pl.when(k == n_k - 1)
    def _():
        z = h_scr[...] + agg_scr[...]                                    # eps = 0
        z = jnp.dot(z.astype(bf16), w1_ref[0],
                    preferred_element_type=f32) + b1_ref[0]              # Linear+BN (folded)
        z = jnp.maximum(z, 0.0)
        z = jnp.dot(z.astype(bf16), w2_ref[0],
                    preferred_element_type=f32) + b2_ref[0]
        h_scr[...] = jnp.maximum(z, 0.0)        # outer ReLU; dropout = identity (eval)

    # ---- very last step: global_add_pool ----
    @pl.when(jnp.logical_and(layer == n_layers - 1, k == n_k - 1))
    def _():
        pooled_ref[...] = jnp.dot(p_ref[...], h_scr[...].astype(bf16),
                                  preferred_element_type=f32)


def gin_forward(x, edge_index, batch, edge_attr, edge_atten, params, num_graphs,
                *, tile_e=512):
    f32, bf16 = jnp.float32, jnp.bfloat16
    n_nodes, x_dim = x.shape
    n_edges = edge_index.shape[1]
    e_attr_dim = edge_attr.shape[1]
    n_layers, hidden = params['w1'].shape[0], params['w1'].shape[2]
    if edge_atten is None:
        edge_atten = jnp.ones((n_edges, 1), f32)

    # ---------------- host-side prep (plain JAX glue) ----------------
    # pad edges to a multiple of the edge-tile size; padded edges get all-zero
    # gather rows / scatter columns, so they contribute nothing.
    tile_e = _round_up(max(tile_e, 128), 128)
    e_pad = _round_up(max(n_edges, 1), tile_e)
    src = jnp.full((e_pad,), -1, jnp.int32).at[:n_edges].set(edge_index[0])
    dst = jnp.full((e_pad,), -1, jnp.int32).at[:n_edges].set(edge_index[1])
    att = jnp.zeros((e_pad, 1), f32).at[:n_edges].set(edge_atten.astype(f32))
    ea_pad = jnp.zeros((e_pad, e_attr_dim), f32).at[:n_edges].set(edge_attr)

    # bf16 one-hot gather / scatter / pool matrices (0/1 exact in bf16);
    # edge attention folded into the scatter matrix.
    gth = jax.nn.one_hot(src, n_nodes, dtype=bf16)                        # [Ep, N]
    sct = (jax.nn.one_hot(dst, n_nodes, dtype=f32) * att).T.astype(bf16)  # [N, Ep]
    pool = jax.nn.one_hot(batch, num_graphs, dtype=bf16).T                # [B, N]

    # fold eval-mode BatchNorm into the first MLP Linear (exact in eval mode).
    scale = params['bn_gamma'] * lax.rsqrt(params['bn_var'] + BN_EPS)     # [L,1,H]
    w1 = (params['w1'] * scale).astype(bf16)
    b1 = (params['b1'] - params['bn_mean']) * scale + params['bn_beta']
    w2 = params['w2'].astype(bf16)
    b2 = params['b2']
    nw, nb = params['node_w'].astype(bf16), params['node_b']
    ew, eb = params['edge_w'].astype(bf16), params['edge_b']

    grid = (n_layers, e_pad // tile_e)
    c2 = lambda l, k: (0, 0)
    per_layer = lambda l, k: (l, 0, 0)
    in_specs = [
        pl.BlockSpec((n_nodes, x_dim), c2),                       # x
        pl.BlockSpec((num_graphs, n_nodes), c2),                  # pool one-hot
        pl.BlockSpec((tile_e, n_nodes), lambda l, k: (k, 0)),     # gather tile
        pl.BlockSpec((n_nodes, tile_e), lambda l, k: (0, k)),     # scatter*att tile
        pl.BlockSpec((tile_e, e_attr_dim), lambda l, k: (k, 0)),  # edge_attr tile
        pl.BlockSpec((x_dim, hidden), c2),                        # node_w
        pl.BlockSpec((1, hidden), c2),                            # node_b
        pl.BlockSpec((e_attr_dim, hidden), c2),                   # edge_w
        pl.BlockSpec((1, hidden), c2),                            # edge_b
        pl.BlockSpec((1, hidden, hidden), per_layer),             # w1 (BN folded)
        pl.BlockSpec((1, 1, hidden), per_layer),                  # b1 (BN folded)
        pl.BlockSpec((1, hidden, hidden), per_layer),             # w2
        pl.BlockSpec((1, 1, hidden), per_layer),                  # b2
    ]

    pooled = pl.pallas_call(
        gin_kernel,
        out_shape=jax.ShapeDtypeStruct((num_graphs, hidden), f32),
        grid_spec=pltpu.PrefetchScalarGridSpec(
            num_scalar_prefetch=0,
            grid=grid,
            in_specs=in_specs,
            out_specs=pl.BlockSpec((num_graphs, hidden), c2),
            scratch_shapes=[pltpu.VMEM((n_nodes, hidden), f32),   # resident node state h
                            pltpu.VMEM((n_nodes, hidden), f32)],  # scatter accumulator
        ),
        compiler_params=pltpu.CompilerParams(
            # layer axis and edge-reduction axis both carry sequential deps
            dimension_semantics=("arbitrary", "arbitrary"),
            vmem_limit_bytes=32 * 1024 * 1024,
        ),
    )(x, pool, gth, sct, ea_pad, nw, nb, ew, eb, w1, b1, w2, b2)

    # final classifier in plain JAX (keeps the kernel output lane-dense).
    logits = pooled @ params['fc_w'] + params['fc_b']
    return logits, pooled


def gin_reference(x, edge_index, batch, edge_attr, edge_atten, params, num_graphs):
    """Plain-JAX f32 reference with the original (unfolded) eval-mode semantics."""
    src, dst = edge_index[0], edge_index[1]
    h = x @ params['node_w'] + params['node_b']
    ea = edge_attr @ params['edge_w'] + params['edge_b']
    for l in range(params['w1'].shape[0]):
        msg = jax.nn.relu(h[src] + ea) * edge_atten
        agg = jax.ops.segment_sum(msg, dst, num_segments=h.shape[0])
        z = h + agg
        z = z @ params['w1'][l] + params['b1'][l]
        z = ((z - params['bn_mean'][l]) * lax.rsqrt(params['bn_var'][l] + BN_EPS)
             * params['bn_gamma'][l] + params['bn_beta'][l])
        z = jax.nn.relu(z)
        z = z @ params['w2'][l] + params['b2'][l]
        h = jax.nn.relu(z)
    pooled = jax.ops.segment_sum(h, batch, num_segments=num_graphs)
    return pooled @ params['fc_w'] + params['fc_b'], pooled


def init_params(key, x_dim, edge_attr_dim, hidden, n_layers, out_dim):
    ks = jax.random.split(key, 12)
    f32 = jnp.float32

    def lin_w(k, fan_in, shape):
        return jax.random.uniform(k, shape, f32, -1.0, 1.0) / jnp.sqrt(jnp.asarray(fan_in, f32))

    return {
        'node_w': lin_w(ks[0], x_dim, (x_dim, hidden)),
        'node_b': jnp.zeros((1, hidden), f32),
        'edge_w': lin_w(ks[1], edge_attr_dim, (edge_attr_dim, hidden)),
        'edge_b': jnp.zeros((1, hidden), f32),
        'w1': lin_w(ks[2], hidden, (n_layers, hidden, hidden)),
        'b1': 0.01 * jax.random.normal(ks[3], (n_layers, 1, hidden), f32),
        # non-trivial eval-mode BatchNorm statistics (exercise the folding)
        'bn_gamma': jax.random.uniform(ks[4], (n_layers, 1, hidden), f32, 0.5, 1.5),
        'bn_beta': 0.1 * jax.random.normal(ks[5], (n_layers, 1, hidden), f32),
        'bn_mean': 0.1 * jax.random.normal(ks[6], (n_layers, 1, hidden), f32),
        'bn_var': jax.random.uniform(ks[7], (n_layers, 1, hidden), f32, 0.5, 1.5),
        'w2': lin_w(ks[8], hidden, (n_layers, hidden, hidden)),
        'b2': 0.01 * jax.random.normal(ks[9], (n_layers, 1, hidden), f32),
        'fc_w': lin_w(ks[10], hidden, (hidden, out_dim)),
        'fc_b': jnp.zeros((1, out_dim), f32),
    }


if __name__ == "__main__":
    key = jax.random.PRNGKey(0)
    k_x, k_ea, k_src, k_dst, k_att, k_par = jax.random.split(key, 6)

    # Small synthetic batch: 2 graphs x 32 nodes, 200 directed edges total.
    N_NODES, N_EDGES, N_GRAPHS = 64, 200, 2
    X_DIM, EDGE_ATTR_DIM, HIDDEN = 8, 4, 32
    NUM_CLASS, MULTI_LABEL = 2, False
    OUT_DIM = 1 if (NUM_CLASS == 2 and not MULTI_LABEL) else NUM_CLASS

    x = jax.random.normal(k_x, (N_NODES, X_DIM), jnp.float32)
    edge_attr = jax.random.normal(k_ea, (N_EDGES, EDGE_ATTR_DIM), jnp.float32)
    batch = jnp.concatenate([jnp.zeros(N_NODES // 2, jnp.int32),
                             jnp.ones(N_NODES // 2, jnp.int32)])

    # keep edges inside their own graph (graph 0: nodes [0,32), graph 1: [32,64))
    half_e = N_EDGES // 2
    src = jnp.concatenate([jax.random.randint(k_src, (half_e,), 0, 32),
                           jax.random.randint(jax.random.fold_in(k_src, 1), (half_e,), 32, 64)])
    dst = jnp.concatenate([jax.random.randint(k_dst, (half_e,), 0, 32),
                           jax.random.randint(jax.random.fold_in(k_dst, 1), (half_e,), 32, 64)])
    edge_index = jnp.stack([src, dst]).astype(jnp.int32)                 # [2, E]
    edge_atten = jax.random.uniform(k_att, (N_EDGES, 1), jnp.float32)

    params = init_params(k_par, X_DIM, EDGE_ATTR_DIM, HIDDEN, N_LAYERS, OUT_DIM)

    # tile_e=128 -> 2 edge tiles per layer, exercising the streaming/accumulation path.
    logits, pooled = gin_forward(x, edge_index, batch, edge_attr, edge_atten,
                                 params, N_GRAPHS, tile_e=128)
    jax.block_until_ready((logits, pooled))

    assert logits.shape == (N_GRAPHS, OUT_DIM)
    assert pooled.shape == (N_GRAPHS, HIDDEN)

    # Numerical check against a plain-JAX f32 reference. Loose tolerance because
    # the kernel runs its matmuls in bf16 (with f32 accumulation).
    _, ref_pooled = gin_reference(x, edge_index, batch, edge_attr, edge_atten,
                                  params, N_GRAPHS)
    np.testing.assert_allclose(np.asarray(pooled), np.asarray(ref_pooled),
                               rtol=1e-1, atol=1e-1)

    print("KERNEL_OK")
</pallas_src>

<mosaic_0001>
module attributes {stable_mosaic.version = 11 : i64} {
  func.func @gin_kernel(%arg0: i32, %arg1: i32, %arg2: memref<64x8xf32, #tpu.memory_space<vmem>>, %arg3: memref<2x64xbf16, #tpu.memory_space<vmem>>, %arg4: memref<128x64xbf16, #tpu.memory_space<vmem>>, %arg5: memref<64x128xbf16, #tpu.memory_space<vmem>>, %arg6: memref<128x4xf32, #tpu.memory_space<vmem>>, %arg7: memref<8x32xbf16, #tpu.memory_space<vmem>>, %arg8: memref<1x32xf32, #tpu.memory_space<vmem>>, %arg9: memref<4x32xbf16, #tpu.memory_space<vmem>>, %arg10: memref<1x32xf32, #tpu.memory_space<vmem>>, %arg11: memref<1x32x32xbf16, #tpu.memory_space<vmem>>, %arg12: memref<1x1x32xf32, #tpu.memory_space<vmem>>, %arg13: memref<1x32x32xbf16, #tpu.memory_space<vmem>>, %arg14: memref<1x1x32xf32, #tpu.memory_space<vmem>>, %arg15: memref<2x32xf32, #tpu.memory_space<vmem>>, %arg16: memref<64x32xf32, #tpu.memory_space<vmem>>, %arg17: memref<64x32xf32, #tpu.memory_space<vmem>>) attributes {dimension_semantics = [#tpu.dimension_semantics<arbitrary>, #tpu.dimension_semantics<arbitrary>], iteration_bounds = array<i64: 2, 2>, scalar_prefetch = 0 : i64, scratch_operands = 2 : i64, tpu.core_type = #tpu.core_type<tc>, window_params = [{pipeline_mode = #tpu.pipeline_mode<synchronous>, transform_indices = @transform_0, window_bounds = array<i64: 64, 8>}, {pipeline_mode = #tpu.pipeline_mode<synchronous>, transform_indices = @transform_1, window_bounds = array<i64: 2, 64>}, {transform_indices = @transform_2, window_bounds = array<i64: 128, 64>}, {transform_indices = @transform_3, window_bounds = array<i64: 64, 128>}, {transform_indices = @transform_4, window_bounds = array<i64: 128, 4>}, {pipeline_mode = #tpu.pipeline_mode<synchronous>, transform_indices = @transform_5, window_bounds = array<i64: 8, 32>}, {pipeline_mode = #tpu.pipeline_mode<synchronous>, transform_indices = @transform_6, window_bounds = array<i64: 1, 32>}, {pipeline_mode = #tpu.pipeline_mode<synchronous>, transform_indices = @transform_7, window_bounds = array<i64: 4, 32>}, {pipeline_mode = #tpu.pipeline_mode<synchronous>, transform_indices = @transform_8, window_bounds = array<i64: 1, 32>}, {transform_indices = @transform_9, window_bounds = array<i64: 1, 32, 32>}, {transform_indices = @transform_10, window_bounds = array<i64: 1, 1, 32>}, {transform_indices = @transform_11, window_bounds = array<i64: 1, 32, 32>}, {transform_indices = @transform_12, window_bounds = array<i64: 1, 1, 32>}, {pipeline_mode = #tpu.pipeline_mode<synchronous>, transform_indices = @transform_13, window_bounds = array<i64: 2, 32>}]} {
    %c0_i32 = arith.constant 0 : i32
    %0 = arith.cmpi eq, %arg0, %c0_i32 : i32
    %c0_i32_0 = arith.constant 0 : i32
    %1 = arith.cmpi eq, %arg1, %c0_i32_0 : i32
    %2 = arith.andi %0, %1 : i1
    %3 = arith.extui %2 : i1 to i32
    %c0_i32_1 = arith.constant 0 : i32
    %4 = arith.cmpi ne, %3, %c0_i32_1 : i32
    scf.if %4 {
      %c0_26 = arith.constant 0 : index
      %c0_27 = arith.constant 0 : index
      %36 = vector.load %arg2[%c0_26, %c0_27] : memref<64x8xf32, #tpu.memory_space<vmem>>, vector<64x8xf32>
      %37 = arith.truncf %36 : vector<64x8xf32> to vector<64x8xbf16>
      %c0_28 = arith.constant 0 : index
      %c0_29 = arith.constant 0 : index
      %38 = vector.load %arg7[%c0_28, %c0_29] : memref<8x32xbf16, #tpu.memory_space<vmem>>, vector<8x32xbf16>
      %cst_30 = arith.constant dense<0.000000e+00> : vector<64x32xf32>
      %39 = tpu.matmul %37, %38, %cst_30 {dimension_numbers = #tpu.dot_dimension_numbers<[1], [0], [0], [1], [0, 0, 1, 1], [], []>} : vector<64x8xbf16>, vector<8x32xbf16>, vector<64x32xf32> -> vector<64x32xf32>
      %c0_31 = arith.constant 0 : index
      %c0_32 = arith.constant 0 : index
      %40 = vector.load %arg8[%c0_31, %c0_32] : memref<1x32xf32, #tpu.memory_space<vmem>>, vector<1x32xf32>
      %41 = vector.broadcast %40 : vector<1x32xf32> to vector<64x32xf32>
      %42 = arith.addf %39, %41 : vector<64x32xf32>
      %c0_33 = arith.constant 0 : index
      %c0_34 = arith.constant 0 : index
      %43 = vector.load %arg16[%c0_33, %c0_34] : memref<64x32xf32, #tpu.memory_space<vmem>>, vector<64x32xf32>
      tpu.vector_store %arg16[%c0_33, %c0_34], %42 {strides = array<i32>} : memref<64x32xf32, #tpu.memory_space<vmem>>, vector<64x32xf32>,
    } else {
    }
    %c0_i32_2 = arith.constant 0 : i32
    %5 = arith.cmpi eq, %arg1, %c0_i32_2 : i32
    %6 = arith.extui %5 : i1 to i32
    %c0_i32_3 = arith.constant 0 : i32
    %7 = arith.cmpi ne, %6, %c0_i32_3 : i32
    scf.if %7 {
      %cst_26 = arith.constant 0.000000e+00 : f32
      %36 = vector.broadcast %cst_26 : f32 to vector<64x32xf32>
      %c0_27 = arith.constant 0 : index
      %c0_28 = arith.constant 0 : index
      %37 = vector.load %arg17[%c0_27, %c0_28] : memref<64x32xf32, #tpu.memory_space<vmem>>, vector<64x32xf32>
      tpu.vector_store %arg17[%c0_27, %c0_28], %36 {strides = array<i32>} : memref<64x32xf32, #tpu.memory_space<vmem>>, vector<64x32xf32>,
    } else {
    }
    %c0 = arith.constant 0 : index
    %c0_4 = arith.constant 0 : index
    %8 = vector.load %arg16[%c0, %c0_4] : memref<64x32xf32, #tpu.memory_space<vmem>>, vector<64x32xf32>
    %9 = arith.truncf %8 : vector<64x32xf32> to vector<64x32xbf16>
    %c0_5 = arith.constant 0 : index
    %c0_6 = arith.constant 0 : index
    %10 = vector.load %arg4[%c0_5, %c0_6] : memref<128x64xbf16, #tpu.memory_space<vmem>>, vector<128x64xbf16>
    %cst = arith.constant dense<0.000000e+00> : vector<128x32xf32>
    %11 = tpu.matmul %10, %9, %cst {dimension_numbers = #tpu.dot_dimension_numbers<[1], [0], [0], [1], [0, 0, 1, 1], [], []>} : vector<128x64xbf16>, vector<64x32xbf16>, vector<128x32xf32> -> vector<128x32xf32>
    %c0_7 = arith.constant 0 : index
    %c0_8 = arith.constant 0 : index
    %12 = vector.load %arg6[%c0_7, %c0_8] : memref<128x4xf32, #tpu.memory_space<vmem>>, vector<128x4xf32>
    %13 = arith.truncf %12 : vector<128x4xf32> to vector<128x4xbf16>
    %c0_9 = arith.constant 0 : index
    %c0_10 = arith.constant 0 : index
    %14 = vector.load %arg9[%c0_9, %c0_10] : memref<4x32xbf16, #tpu.memory_space<vmem>>, vector<4x32xbf16>
    %cst_11 = arith.constant dense<0.000000e+00> : vector<128x32xf32>
    %15 = tpu.matmul %13, %14, %cst_11 {dimension_numbers = #tpu.dot_dimension_numbers<[1], [0], [0], [1], [0, 0, 1, 1], [], []>} : vector<128x4xbf16>, vector<4x32xbf16>, vector<128x32xf32> -> vector<128x32xf32>
    %c0_12 = arith.constant 0 : index
    %c0_13 = arith.constant 0 : index
    %16 = vector.load %arg10[%c0_12, %c0_13] : memref<1x32xf32, #tpu.memory_space<vmem>>, vector<1x32xf32>
    %17 = vector.broadcast %16 : vector<1x32xf32> to vector<128x32xf32>
    %18 = arith.addf %15, %17 : vector<128x32xf32>
    %19 = arith.addf %11, %18 : vector<128x32xf32>
    %cst_14 = arith.constant 0.000000e+00 : f32
    %20 = vector.broadcast %cst_14 : f32 to vector<128x32xf32>
    %21 = arith.maximumf %19, %20 : vector<128x32xf32>
    %22 = arith.truncf %21 : vector<128x32xf32> to vector<128x32xbf16>
    %c0_15 = arith.constant 0 : index
    %c0_16 = arith.constant 0 : index
    %23 = vector.load %arg17[%c0_15, %c0_16] : memref<64x32xf32, #tpu.memory_space<vmem>>, vector<64x32xf32>
    %c0_17 = arith.constant 0 : index
    %c0_18 = arith.constant 0 : index
    %24 = vector.load %arg5[%c0_17, %c0_18] : memref<64x128xbf16, #tpu.memory_space<vmem>>, vector<64x128xbf16>
    %cst_19 = arith.constant dense<0.000000e+00> : vector<64x32xf32>
    %25 = tpu.matmul %24, %22, %cst_19 {dimension_numbers = #tpu.dot_dimension_numbers<[1], [0], [0], [1], [0, 0, 1, 1], [], []>} : vector<64x128xbf16>, vector<128x32xbf16>, vector<64x32xf32> -> vector<64x32xf32>
    %26 = arith.addf %23, %25 : vector<64x32xf32>
    %c0_20 = arith.constant 0 : index
    %c0_21 = arith.constant 0 : index
    %27 = vector.load %arg17[%c0_20, %c0_21] : memref<64x32xf32, #tpu.memory_space<vmem>>, vector<64x32xf32>
    tpu.vector_store %arg17[%c0_20, %c0_21], %26 {strides = array<i32>} : memref<64x32xf32, #tpu.memory_space<vmem>>, vector<64x32xf32>,
    %c1_i32 = arith.constant 1 : i32
    %28 = arith.cmpi eq, %arg1, %c1_i32 : i32
    %29 = arith.extui %28 : i1 to i32
    %c0_i32_22 = arith.constant 0 : i32
    %30 = arith.cmpi ne, %29, %c0_i32_22 : i32
    scf.if %30 {
      %c0_26 = arith.constant 0 : index
      %c0_27 = arith.constant 0 : index
      %36 = vector.load %arg16[%c0_26, %c0_27] : memref<64x32xf32, #tpu.memory_space<vmem>>, vector<64x32xf32>
      %c0_28 = arith.constant 0 : index
      %c0_29 = arith.constant 0 : index
      %37 = vector.load %arg17[%c0_28, %c0_29] : memref<64x32xf32, #tpu.memory_space<vmem>>, vector<64x32xf32>
      %38 = arith.addf %36, %37 : vector<64x32xf32>
      %39 = arith.truncf %38 : vector<64x32xf32> to vector<64x32xbf16>
      %c0_30 = arith.constant 0 : index
      %c0_31 = arith.constant 0 : index
      %c0_32 = arith.constant 0 : index
      %40 = vector.load %arg11[%c0_30, %c0_31, %c0_32] : memref<1x32x32xbf16, #tpu.memory_space<vmem>>, vector<1x32x32xbf16>
      %41 = vector.shape_cast %40 : vector<1x32x32xbf16> to vector<32x32xbf16>
      %cst_33 = arith.constant dense<0.000000e+00> : vector<64x32xf32>
      %42 = tpu.matmul %39, %41, %cst_33 {dimension_numbers = #tpu.dot_dimension_numbers<[1], [0], [0], [1], [0, 0, 1, 1], [], []>} : vector<64x32xbf16>, vector<32x32xbf16>, vector<64x32xf32> -> vector<64x32xf32>
      %c0_34 = arith.constant 0 : index
      %c0_35 = arith.constant 0 : index
      %c0_36 = arith.constant 0 : index
      %43 = vector.load %arg12[%c0_34, %c0_35, %c0_36] : memref<1x1x32xf32, #tpu.memory_space<vmem>>, vector<1x1x32xf32>
      %44 = vector.shape_cast %43 : vector<1x1x32xf32> to vector<1x32xf32>
      %45 = vector.broadcast %44 : vector<1x32xf32> to vector<64x32xf32>
      %46 = arith.addf %42, %45 : vector<64x32xf32>
      %cst_37 = arith.constant 0.000000e+00 : f32
      %47 = vector.broadcast %cst_37 : f32 to vector<64x32xf32>
      %48 = arith.maximumf %46, %47 : vector<64x32xf32>
      %49 = arith.truncf %48 : vector<64x32xf32> to vector<64x32xbf16>
      %c0_38 = arith.constant 0 : index
      %c0_39 = arith.constant 0 : index
      %c0_40 = arith.constant 0 : index
      %50 = vector.load %arg13[%c0_38, %c0_39, %c0_40] : memref<1x32x32xbf16, #tpu.memory_space<vmem>>, vector<1x32x32xbf16>
      %51 = vector.shape_cast %50 : vector<1x32x32xbf16> to vector<32x32xbf16>
      %cst_41 = arith.constant dense<0.000000e+00> : vector<64x32xf32>
      %52 = tpu.matmul %49, %51, %cst_41 {dimension_numbers = #tpu.dot_dimension_numbers<[1], [0], [0], [1], [0, 0, 1, 1], [], []>} : vector<64x32xbf16>, vector<32x32xbf16>, vector<64x32xf32> -> vector<64x32xf32>
      %c0_42 = arith.constant 0 : index
      %c0_43 = arith.constant 0 : index
      %c0_44 = arith.constant 0 : index
      %53 = vector.load %arg14[%c0_42, %c0_43, %c0_44] : memref<1x1x32xf32, #tpu.memory_space<vmem>>, vector<1x1x32xf32>
      %54 = vector.shape_cast %53 : vector<1x1x32xf32> to vector<1x32xf32>
      %55 = vector.broadcast %54 : vector<1x32xf32> to vector<64x32xf32>
      %56 = arith.addf %52, %55 : vector<64x32xf32>
      %cst_45 = arith.constant 0.000000e+00 : f32
      %57 = vector.broadcast %cst_45 : f32 to vector<64x32xf32>
      %58 = arith.maximumf %56, %57 : vector<64x32xf32>
      %c0_46 = arith.constant 0 : index
      %c0_47 = arith.constant 0 : index
      %59 = vector.load %arg16[%c0_46, %c0_47] : memref<64x32xf32, #tpu.memory_space<vmem>>, vector<64x32xf32>
      tpu.vector_store %arg16[%c0_46, %c0_47], %58 {strides = array<i32>} : memref<64x32xf32, #tpu.memory_space<vmem>>, vector<64x32xf32>,
    } else {
    }
    %c1_i32_23 = arith.constant 1 : i32
    %31 = arith.cmpi eq, %arg0, %c1_i32_23 : i32
    %c1_i32_24 = arith.constant 1 : i32
    %32 = arith.cmpi eq, %arg1, %c1_i32_24 : i32
    %33 = arith.andi %31, %32 : i1
    %34 = arith.extui %33 : i1 to i32
    %c0_i32_25 = arith.constant 0 : i32
    %35 = arith.cmpi ne, %34, %c0_i32_25 : i32
    scf.if %35 {
      %c0_26 = arith.constant 0 : index
      %c0_27 = arith.constant 0 : index
      %36 = vector.load %arg3[%c0_26, %c0_27] : memref<2x64xbf16, #tpu.memory_space<vmem>>, vector<2x64xbf16>
      %c0_28 = arith.constant 0 : index
      %c0_29 = arith.constant 0 : index
      %37 = vector.load %arg16[%c0_28, %c0_29] : memref<64x32xf32, #tpu.memory_space<vmem>>, vector<64x32xf32>
      %38 = arith.truncf %37 : vector<64x32xf32> to vector<64x32xbf16>
      %cst_30 = arith.constant dense<0.000000e+00> : vector<2x32xf32>
      %39 = tpu.matmul %36, %38, %cst_30 {dimension_numbers = #tpu.dot_dimension_numbers<[1], [0], [0], [1], [0, 0, 1, 1], [], []>} : vector<2x64xbf16>, vector<64x32xbf16>, vector<2x32xf32> -> vector<2x32xf32>
      %c0_31 = arith.constant 0 : index
      %c0_32 = arith.constant 0 : index
      %40 = vector.load %arg15[%c0_31, %c0_32] : memref<2x32xf32, #tpu.memory_space<vmem>>, vector<2x32xf32>
      tpu.vector_store %arg15[%c0_31, %c0_32], %39 {strides = array<i32>} : memref<2x32xf32, #tpu.memory_space<vmem>>, vector<2x32xf32>,
    } else {
    }
    return
  }
  func.func @transform_0(%arg0: i32, %arg1: i32) -> (i32, i32) {
    %c0_i32 = arith.constant 0 : i32
    %c0_i32_0 = arith.constant 0 : i32
    %c0_i32_1 = arith.constant 0 : i32
    return %c0_i32, %c0_i32_0 : i32, i32
  }
  func.func @transform_1(%arg0: i32, %arg1: i32) -> (i32, i32) {
    %c0_i32 = arith.constant 0 : i32
    %c0_i32_0 = arith.constant 0 : i32
    %c0_i32_1 = arith.constant 0 : i32
    return %c0_i32, %c0_i32_0 : i32, i32
  }
  func.func @transform_2(%arg0: i32, %arg1: i32) -> (i32, i32) {
    %c0_i32 = arith.constant 0 : i32
    %c0_i32_0 = arith.constant 0 : i32
    return %arg1, %c0_i32 : i32, i32
  }
  func.func @transform_3(%arg0: i32, %arg1: i32) -> (i32, i32) {
    %c0_i32 = arith.constant 0 : i32
    %c0_i32_0 = arith.constant 0 : i32
    return %c0_i32, %arg1 : i32, i32
  }
  func.func @transform_4(%arg0: i32, %arg1: i32) -> (i32, i32) {
    %c0_i32 = arith.constant 0 : i32
    %c0_i32_0 = arith.constant 0 : i32
    return %arg1, %c0_i32 : i32, i32
  }
  func.func @transform_5(%arg0: i32, %arg1: i32) -> (i32, i32) {
    %c0_i32 = arith.constant 0 : i32
    %c0_i32_0 = arith.constant 0 : i32
    %c0_i32_1 = arith.constant 0 : i32
    return %c0_i32, %c0_i32_0 : i32, i32
  }
  func.func @transform_6(%arg0: i32, %arg1: i32) -> (i32, i32) {
    %c0_i32 = arith.constant 0 : i32
    %c0_i32_0 = arith.constant 0 : i32
    %c0_i32_1 = arith.constant 0 : i32
    return %c0_i32, %c0_i32_0 : i32, i32
  }
  func.func @transform_7(%arg0: i32, %arg1: i32) -> (i32, i32) {
    %c0_i32 = arith.constant 0 : i32
    %c0_i32_0 = arith.constant 0 : i32
    %c0_i32_1 = arith.constant 0 : i32
    return %c0_i32, %c0_i32_0 : i32, i32
  }
  func.func @transform_8(%arg0: i32, %arg1: i32) -> (i32, i32) {
    %c0_i32 = arith.constant 0 : i32
    %c0_i32_0 = arith.constant 0 : i32
    %c0_i32_1 = arith.constant 0 : i32
    return %c0_i32, %c0_i32_0 : i32, i32
  }
  func.func @transform_9(%arg0: i32, %arg1: i32) -> (i32, i32, i32) {
    %c0_i32 = arith.constant 0 : i32
    %c0_i32_0 = arith.constant 0 : i32
    %c0_i32_1 = arith.constant 0 : i32
    return %arg0, %c0_i32, %c0_i32_0 : i32, i32, i32
  }
  func.func @transform_10(%arg0: i32, %arg1: i32) -> (i32, i32, i32) {
    %c0_i32 = arith.constant 0 : i32
    %c0_i32_0 = arith.constant 0 : i32
    %c0_i32_1 = arith.constant 0 : i32
    return %arg0, %c0_i32, %c0_i32_0 : i32, i32, i32
  }
  func.func @transform_11(%arg0: i32, %arg1: i32) -> (i32, i32, i32) {
    %c0_i32 = arith.constant 0 : i32
    %c0_i32_0 = arith.constant 0 : i32
    %c0_i32_1 = arith.constant 0 : i32
    return %arg0, %c0_i32, %c0_i32_0 : i32, i32, i32
  }
  func.func @transform_12(%arg0: i32, %arg1: i32) -> (i32, i32, i32) {
    %c0_i32 = arith.constant 0 : i32
    %c0_i32_0 = arith.constant 0 : i32
    %c0_i32_1 = arith.constant 0 : i32
    return %arg0, %c0_i32, %c0_i32_0 : i32, i32, i32
  }
  func.func @transform_13(%arg0: i32, %arg1: i32) -> (i32, i32) {
    %c0_i32 = arith.constant 0 : i32
    %c0_i32_0 = arith.constant 0 : i32
    %c0_i32_1 = arith.constant 0 : i32
    return %c0_i32, %c0_i32_0 : i32, i32
  }
}

</mosaic_0001>

<llo_original>
// kernel: tpu_custom_call.1
$region0: #{tpu_custom_call.1}
  #allocation0 [shape = 'u32[]', space=smem, size = 0x4, offset = 0x4, fixed_abs, tag = 'smem constant byte address 0x4 - core index']
  #allocation1 [shape = 'u32[144,128]{1,0:T(1,128)}', space=vmem, size = 0x12000, scoped, tag = 'internal scratch']
  #allocation2 [shape = 'f32[64,32]{1,0:T(8,128)}', space=vmem, size = 0x8000, scoped, tag = 'scratch operand']
  #allocation3 [shape = 'f32[64,32]{1,0:T(8,128)}', space=vmem, size = 0x8000, scoped, tag = 'scratch operand']
  %s0 = inlined_call_operand.vmem [shape: f32[64,8], index: 0, kind: input, shape index: {}]
  %s1 = inlined_call_operand.vmem [shape: bf16[2,64], index: 1, kind: input, shape index: {}]
  %s2 = inlined_call_operand.vmem [shape: bf16[256,64], index: 2, kind: input, shape index: {}]
  %s3 = inlined_call_operand.vmem [shape: bf16[64,256], index: 3, kind: input, shape index: {}]
  %s4 = inlined_call_operand.vmem [shape: f32[256,4], index: 4, kind: input, shape index: {}]
  %s5 = inlined_call_operand.vmem [shape: bf16[8,32], index: 5, kind: input, shape index: {}]
  %s6 = inlined_call_operand.vmem [shape: f32[1,32], index: 6, kind: input, shape index: {}]
  %s7 = inlined_call_operand.vmem [shape: bf16[4,32], index: 7, kind: input, shape index: {}]
  %s8 = inlined_call_operand.vmem [shape: f32[1,32], index: 8, kind: input, shape index: {}]
  %s9 = inlined_call_operand.vmem [shape: bf16[2,32,32], index: 9, kind: input, shape index: {}]
  %s10 = inlined_call_operand.vmem [shape: f32[2,1,32], index: 10, kind: input, shape index: {}]
  %s11 = inlined_call_operand.vmem [shape: bf16[2,32,32], index: 11, kind: input, shape index: {}]
  %s12 = inlined_call_operand.vmem [shape: f32[2,1,32], index: 12, kind: input, shape index: {}]
  %s13 = inlined_call_operand.hbm [shape: f32[2,32], index: 13, kind: output, shape index: {}]
  %s14 = sld [smem:[#allocation0]]
  $region142: #{tpu_custom_call.1} parent=0
    _
  %s16 = ssub.s32 1, %s14
  %s17 = scalar_select 0, %s16, %s14
  $region1: #{tpu_custom_call.1} parent=0
    #allocation4 [shape = 'u8[32768]{0}', space=vmem, size = 0x8000, scoped, tag = 'input window, operand 3']
    #allocation5 [shape = 'u8[1024]{0}', space=vmem, size = 0x400, scoped, tag = 'output window, operand 0, single buffered']
    #allocation6 [shape = 's32[2]{0}', space=sflag, size = 0x8, scoped, tag = 'scoped memory for tpu_custom_call.1']
    %18 = vsyncpa [#allocation6], 0
    loop: start=0, step=1, limit=6
    $region2: #{tpu_custom_call.1} parent=1 // loop_pre_header
      _
    $region3: #{tpu_custom_call.1} parent=1 // loop_header
      %s20 = sphi 0, %s24
      %p21 = scmp.ge.s32.totalorder %s20, 6
      %s27 = sphi 0, %s39
      %s28 = sphi 0, %s35
      %s29 = sphi 0, %s27
      %s30 = sphi 0, %s28
      %s31 = sphi 0, %s29
      %s32 = sphi 0, %s30
      %s40 = sphi 0, %s40
      %s42 = sphi 0, %s40
      %s43 = sphi 0, %s42
      %s57 = sphi 0, %s43
      %s61 = sphi 0, %s61
      %s63 = sphi 0, %s61
      %s64 = sphi 0, %s63
      %s78 = sphi 0, %s64
      %s84 = sphi 0, %s86
      %s87 = sphi 0, %s84
      %s88 = sphi 0, %s87
      %s104 = sphi 0, %s88
      %s110 = sphi 0, %s112
      %s113 = sphi 0, %s110
      %s114 = sphi 0, %s113
      %s130 = sphi 0, %s114
      %s136 = sphi 0, %s138
      %s139 = sphi 0, %s136
      %s140 = sphi 0, %s139
      %s156 = sphi 0, %s140
      %s160 = sphi 0, %s160
      %s162 = sphi 0, %s160
      %s163 = sphi 0, %s162
      %s177 = sphi 0, %s163
      %s181 = sphi 0, %s181
      %s183 = sphi 0, %s181
      %s184 = sphi 0, %s183
      %s198 = sphi 0, %s184
      %s202 = sphi 0, %s202
      %s204 = sphi 0, %s202
      %s205 = sphi 0, %s204
      %s219 = sphi 0, %s205
      %s223 = sphi 0, %s223
      %s225 = sphi 0, %s223
      %s226 = sphi 0, %s225
      %s240 = sphi 0, %s226
      %s246 = sphi 0, %s248
      %s249 = sphi 0, %s246
      %s250 = sphi 0, %s249
      %s266 = sphi 0, %s250
      %s272 = sphi 0, %s274
      %s275 = sphi 0, %s272
      %s276 = sphi 0, %s275
      %s292 = sphi 0, %s276
      %s298 = sphi 0, %s300
      %s301 = sphi 0, %s298
      %s302 = sphi 0, %s301
      %s318 = sphi 0, %s302
      %s324 = sphi 0, %s326
      %s327 = sphi 0, %s324
      %s328 = sphi 0, %s327
      %s344 = sphi 0, %s328
      %s348 = sphi 0, %s348
      %s350 = sphi 0, %s348
      %s351 = sphi 0, %s350
      %s365 = sphi 0, %s351
    $region4: #{tpu_custom_call.1} parent=1 // loop_header_branch
      %23 = sbr.rel (%p21) target = $region8
    $region5: #{tpu_custom_call.1} parent=1 // loop_body
      %s25 = ssub.s32 %s20, 1
      %s26 = ssub.s32 %s20, 2
      %s33 = sadd.s32 1, %s28
      %p34 = scmp.ge.s32.totalorder %s33, 2
      %s35 = scalar_select %p34, 0, %s33
      %s36 = sadd.s32 1, %s27
      %s37 = scalar_select %p34, %s36, %s27
      %p38 = scmp.ge.s32.totalorder %s37, 2
      %s39 = scalar_select %p38, 0, %s37
      %s41 = sadd.s32 %s40, 1
      %p44 = scmp.eq.s32.totalorder %s20, 3
      %p45 = scmp.ne.s32.totalorder %s40, %s42
      %p46 = scmp.eq.s32.totalorder %s20, 0
      %p47 = por %p45, %p46
      %p48 = scmp.ne.s32.totalorder %s40, %s42
      %p49 = scmp.eq.s32.totalorder %s25, 3
      %p50 = por %p48, %p49
      %p51 = scmp.ne.s32.totalorder %s42, %s43
      %p52 = scmp.eq.s32.totalorder %s25, 0
      %p53 = por %p51, %p52
      %p54 = scmp.ne.s32.totalorder %s42, %s43
      %p55 = scmp.eq.s32.totalorder %s26, 3
      %p56 = por %p54, %p55
      %p58 = scmp.ne.s32.totalorder %s43, %s57
      %p59 = scmp.eq.s32.totalorder %s26, 0
      %p60 = por %p58, %p59
      %s62 = sadd.s32 %s61, 1
      %p65 = scmp.eq.s32.totalorder %s20, 3
      %p66 = scmp.ne.s32.totalorder %s61, %s63
      %p67 = scmp.eq.s32.totalorder %s20, 0
      %p68 = por %p66, %p67
      %p69 = scmp.ne.s32.totalorder %s61, %s63
      %p70 = scmp.eq.s32.totalorder %s25, 3
      %p71 = por %p69, %p70
      %p72 = scmp.ne.s32.totalorder %s63, %s64
      %p73 = scmp.eq.s32.totalorder %s25, 0
      %p74 = por %p72, %p73
      %p75 = scmp.ne.s32.totalorder %s63, %s64
      %p76 = scmp.eq.s32.totalorder %s26, 3
      %p77 = por %p75, %p76
      %p79 = scmp.ne.s32.totalorder %s64, %s78
      %p80 = scmp.eq.s32.totalorder %s26, 0
      %p81 = por %p79, %p80
      %s82 = ssub.s32 %s28, %s35
      %p83 = scmp.eq.s32.totalorder %s82, 0
      %s85 = sadd.s32 %s84, 1
      %s86 = scalar_select %p83, %s84, %s85
      %p89 = pneg %p83
      %p90 = scmp.eq.s32.totalorder %s20, 3
      %p91 = por %p89, %p90
      %p92 = scmp.ne.s32.totalorder %s84, %s87
      %p93 = scmp.eq.s32.totalorder %s20, 0
      %p94 = por %p92, %p93
      %p95 = scmp.ne.s32.totalorder %s84, %s87
      %p96 = scmp.eq.s32.totalorder %s25, 3
      %p97 = por %p95, %p96
      %p98 = scmp.ne.s32.totalorder %s87, %s88
      %p99 = scmp.eq.s32.totalorder %s25, 0
      %p100 = por %p98, %p99
      %p101 = scmp.ne.s32.totalorder %s87, %s88
      %p102 = scmp.eq.s32.totalorder %s26, 3
      %p103 = por %p101, %p102
      %p105 = scmp.ne.s32.totalorder %s88, %s104
      %p106 = scmp.eq.s32.totalorder %s26, 0
      %p107 = por %p105, %p106
      %s108 = ssub.s32 %s28, %s35
      %p109 = scmp.eq.s32.totalorder %s108, 0
      %s111 = sadd.s32 %s110, 1
      %s112 = scalar_select %p109, %s110, %s111
      %p115 = pneg %p109
      %p116 = scmp.eq.s32.totalorder %s20, 3
      %p117 = por %p115, %p116
      %p118 = scmp.ne.s32.totalorder %s110, %s113
      %p119 = scmp.eq.s32.totalorder %s20, 0
      %p120 = por %p118, %p119
      %p121 = scmp.ne.s32.totalorder %s110, %s113
      %p122 = scmp.eq.s32.totalorder %s25, 3
      %p123 = por %p121, %p122
      %p124 = scmp.ne.s32.totalorder %s113, %s114
      %p125 = scmp.eq.s32.totalorder %s25, 0
      %p126 = por %p124, %p125
      %p127 = scmp.ne.s32.totalorder %s113, %s114
      %p128 = scmp.eq.s32.totalorder %s26, 3
      %p129 = por %p127, %p128
      %p131 = scmp.ne.s32.totalorder %s114, %s130
      %p132 = scmp.eq.s32.totalorder %s26, 0
      %p133 = por %p131, %p132
      %s134 = ssub.s32 %s28, %s35
      %p135 = scmp.eq.s32.totalorder %s134, 0
      %s137 = sadd.s32 %s136, 1
      %s138 = scalar_select %p135, %s136, %s137
      %p141 = pneg %p135
      %p142 = scmp.eq.s32.totalorder %s20, 3
      %p143 = por %p141, %p142
      %p144 = scmp.ne.s32.totalorder %s136, %s139
      %p145 = scmp.eq.s32.totalorder %s20, 0
      %p146 = por %p144, %p145
      %p147 = scmp.ne.s32.totalorder %s136, %s139
      %p148 = scmp.eq.s32.totalorder %s25, 3
      %p149 = por %p147, %p148
      %p150 = scmp.ne.s32.totalorder %s139, %s140
      %p151 = scmp.eq.s32.totalorder %s25, 0
      %p152 = por %p150, %p151
      %p153 = scmp.ne.s32.totalorder %s139, %s140
      %p154 = scmp.eq.s32.totalorder %s26, 3
      %p155 = por %p153, %p154
      %p157 = scmp.ne.s32.totalorder %s140, %s156
      %p158 = scmp.eq.s32.totalorder %s26, 0
      %p159 = por %p157, %p158
      %s161 = sadd.s32 %s160, 1
      %p164 = scmp.eq.s32.totalorder %s20, 3
      %p165 = scmp.ne.s32.totalorder %s160, %s162
      %p166 = scmp.eq.s32.totalorder %s20, 0
      %p167 = por %p165, %p166
      %p168 = scmp.ne.s32.totalorder %s160, %s162
      %p169 = scmp.eq.s32.totalorder %s25, 3
      %p170 = por %p168, %p169
      %p171 = scmp.ne.s32.totalorder %s162, %s163
      %p172 = scmp.eq.s32.totalorder %s25, 0
      %p173 = por %p171, %p172
      %p174 = scmp.ne.s32.totalorder %s162, %s163
      %p175 = scmp.eq.s32.totalorder %s26, 3
      %p176 = por %p174, %p175
      %p178 = scmp.ne.s32.totalorder %s163, %s177
      %p179 = scmp.eq.s32.totalorder %s26, 0
      %p180 = por %p178, %p179
      %s182 = sadd.s32 %s181, 1
      %p185 = scmp.eq.s32.totalorder %s20, 3
      %p186 = scmp.ne.s32.totalorder %s181, %s183
      %p187 = scmp.eq.s32.totalorder %s20, 0
      %p188 = por %p186, %p187
      %p189 = scmp.ne.s32.totalorder %s181, %s183
      %p190 = scmp.eq.s32.totalorder %s25, 3
      %p191 = por %p189, %p190
      %p192 = scmp.ne.s32.totalorder %s183, %s184
      %p193 = scmp.eq.s32.totalorder %s25, 0
      %p194 = por %p192, %p193
      %p195 = scmp.ne.s32.totalorder %s183, %s184
      %p196 = scmp.eq.s32.totalorder %s26, 3
      %p197 = por %p195, %p196
      %p199 = scmp.ne.s32.totalorder %s184, %s198
      %p200 = scmp.eq.s32.totalorder %s26, 0
      %p201 = por %p199, %p200
      %s203 = sadd.s32 %s202, 1
      %p206 = scmp.eq.s32.totalorder %s20, 3
      %p207 = scmp.ne.s32.totalorder %s202, %s204
      %p208 = scmp.eq.s32.totalorder %s20, 0
      %p209 = por %p207, %p208
      %p210 = scmp.ne.s32.totalorder %s202, %s204
      %p211 = scmp.eq.s32.totalorder %s25, 3
      %p212 = por %p210, %p211
      %p213 = scmp.ne.s32.totalorder %s204, %s205
      %p214 = scmp.eq.s32.totalorder %s25, 0
      %p215 = por %p213, %p214
      %p216 = scmp.ne.s32.totalorder %s204, %s205
      %p217 = scmp.eq.s32.totalorder %s26, 3
      %p218 = por %p216, %p217
      %p220 = scmp.ne.s32.totalorder %s205, %s219
      %p221 = scmp.eq.s32.totalorder %s26, 0
      %p222 = por %p220, %p221
      %s224 = sadd.s32 %s223, 1
      %p227 = scmp.eq.s32.totalorder %s20, 3
      %p228 = scmp.ne.s32.totalorder %s223, %s225
      %p229 = scmp.eq.s32.totalorder %s20, 0
      %p230 = por %p228, %p229
      %p231 = scmp.ne.s32.totalorder %s223, %s225
      %p232 = scmp.eq.s32.totalorder %s25, 3
      %p233 = por %p231, %p232
      %p234 = scmp.ne.s32.totalorder %s225, %s226
      %p235 = scmp.eq.s32.totalorder %s25, 0
      %p236 = por %p234, %p235
      %p237 = scmp.ne.s32.totalorder %s225, %s226
      %p238 = scmp.eq.s32.totalorder %s26, 3
      %p239 = por %p237, %p238
      %p241 = scmp.ne.s32.totalorder %s226, %s240
      %p242 = scmp.eq.s32.totalorder %s26, 0
      %p243 = por %p241, %p242
      %s244 = ssub.s32 %s27, %s39
      %p245 = scmp.eq.s32.totalorder %s244, 0
      %s247 = sadd.s32 %s246, 1
      %s248 = scalar_select %p245, %s246, %s247
      %p251 = pneg %p245
      %p252 = scmp.eq.s32.totalorder %s20, 3
      %p253 = por %p251, %p252
      %p254 = scmp.ne.s32.totalorder %s246, %s249
      %p255 = scmp.eq.s32.totalorder %s20, 0
      %p256 = por %p254, %p255
      %p257 = scmp.ne.s32.totalorder %s246, %s249
      %p258 = scmp.eq.s32.totalorder %s25, 3
      %p259 = por %p257, %p258
      %p260 = scmp.ne.s32.totalorder %s249, %s250
      %p261 = scmp.eq.s32.totalorder %s25, 0
      %p262 = por %p260, %p261
      %p263 = scmp.ne.s32.totalorder %s249, %s250
      %p264 = scmp.eq.s32.totalorder %s26, 3
      %p265 = por %p263, %p264
      %p267 = scmp.ne.s32.totalorder %s250, %s266
      %p268 = scmp.eq.s32.totalorder %s26, 0
      %p269 = por %p267, %p268
      %s270 = ssub.s32 %s27, %s39
      %p271 = scmp.eq.s32.totalorder %s270, 0
      %s273 = sadd.s32 %s272, 1
      %s274 = scalar_select %p271, %s272, %s273
      %p277 = pneg %p271
      %p278 = scmp.eq.s32.totalorder %s20, 3
      %p279 = por %p277, %p278
      %p280 = scmp.ne.s32.totalorder %s272, %s275
      %p281 = scmp.eq.s32.totalorder %s20, 0
      %p282 = por %p280, %p281
      %p283 = scmp.ne.s32.totalorder %s272, %s275
      %p284 = scmp.eq.s32.totalorder %s25, 3
      %p285 = por %p283, %p284
      %p286 = scmp.ne.s32.totalorder %s275, %s276
      %p287 = scmp.eq.s32.totalorder %s25, 0
      %p288 = por %p286, %p287
      %p289 = scmp.ne.s32.totalorder %s275, %s276
      %p290 = scmp.eq.s32.totalorder %s26, 3
      %p291 = por %p289, %p290
      %p293 = scmp.ne.s32.totalorder %s276, %s292
      %p294 = scmp.eq.s32.totalorder %s26, 0
      %p295 = por %p293, %p294
      %s296 = ssub.s32 %s27, %s39
      %p297 = scmp.eq.s32.totalorder %s296, 0
      %s299 = sadd.s32 %s298, 1
      %s300 = scalar_select %p297, %s298, %s299
      %p303 = pneg %p297
      %p304 = scmp.eq.s32.totalorder %s20, 3
      %p305 = por %p303, %p304
      %p306 = scmp.ne.s32.totalorder %s298, %s301
      %p307 = scmp.eq.s32.totalorder %s20, 0
      %p308 = por %p306, %p307
      %p309 = scmp.ne.s32.totalorder %s298, %s301
      %p310 = scmp.eq.s32.totalorder %s25, 3
      %p311 = por %p309, %p310
      %p312 = scmp.ne.s32.totalorder %s301, %s302
      %p313 = scmp.eq.s32.totalorder %s25, 0
      %p314 = por %p312, %p313
      %p315 = scmp.ne.s32.totalorder %s301, %s302
      %p316 = scmp.eq.s32.totalorder %s26, 3
      %p317 = por %p315, %p316
      %p319 = scmp.ne.s32.totalorder %s302, %s318
      %p320 = scmp.eq.s32.totalorder %s26, 0
      %p321 = por %p319, %p320
      %s322 = ssub.s32 %s27, %s39
      %p323 = scmp.eq.s32.totalorder %s322, 0
      %s325 = sadd.s32 %s324, 1
      %s326 = scalar_select %p323, %s324, %s325
      %p329 = pneg %p323
      %p330 = scmp.eq.s32.totalorder %s20, 3
      %p331 = por %p329, %p330
      %p332 = scmp.ne.s32.totalorder %s324, %s327
      %p333 = scmp.eq.s32.totalorder %s20, 0
      %p334 = por %p332, %p333
      %p335 = scmp.ne.s32.totalorder %s324, %s327
      %p336 = scmp.eq.s32.totalorder %s25, 3
      %p337 = por %p335, %p336
      %p338 = scmp.ne.s32.totalorder %s327, %s328
      %p339 = scmp.eq.s32.totalorder %s25, 0
      %p340 = por %p338, %p339
      %p341 = scmp.ne.s32.totalorder %s327, %s328
      %p342 = scmp.eq.s32.totalorder %s26, 3
      %p343 = por %p341, %p342
      %p345 = scmp.ne.s32.totalorder %s328, %s344
      %p346 = scmp.eq.s32.totalorder %s26, 0
      %p347 = por %p345, %p346
      %s349 = sadd.s32 %s348, 1
      %p352 = scmp.eq.s32.totalorder %s20, 3
      %p353 = scmp.ne.s32.totalorder %s348, %s350
      %p354 = scmp.eq.s32.totalorder %s20, 0
      %p355 = por %p353, %p354
      %p356 = scmp.ne.s32.totalorder %s348, %s350
      %p357 = scmp.eq.s32.totalorder %s25, 3
      %p358 = por %p356, %p357
      %p359 = scmp.ne.s32.totalorder %s350, %s351
      %p360 = scmp.eq.s32.totalorder %s25, 0
      %p361 = por %p359, %p360
      %p362 = scmp.ne.s32.totalorder %s350, %s351
      %p363 = scmp.eq.s32.totalorder %s26, 3
      %p364 = por %p362, %p363
      %p366 = scmp.ne.s32.totalorder %s351, %s365
      %p367 = scmp.eq.s32.totalorder %s26, 0
      %p368 = por %p366, %p367
      %p369 = scmp.le.s32.totalorder 1, %s20
      %p370 = scmp.lt.s32.totalorder %s20, 5
      %p371 = pnand %p369, %p370
      %p372 = pneg %p371
      // Predicated region
      $region9: #{tpu_custom_call.1} parent=5 // pred_check
        _
      $region10: #{tpu_custom_call.1} parent=5 // pred_check_branch
        %374 = sbr.rel (%p371) target = $region12
      $region11: #{tpu_custom_call.1} parent=5 // pred_region
        %s375 = ssub.s32 %s20, 1
        // Predicated region
        $region13: #{tpu_custom_call.1} parent=11 // pred_check
          %p376 = pneg %p53
        $region14: #{tpu_custom_call.1} parent=11 // pred_check_branch
          %378 = sbr.rel (%p376) target = $region16
        $region15: #{tpu_custom_call.1} parent=11 // pred_region
          _
        $region16: #{tpu_custom_call.1} parent=11 // pred_fallthru
          _
        // Predicated region
        $region17: #{tpu_custom_call.1} parent=11 // pred_check
          %p379 = pneg %p74
        $region18: #{tpu_custom_call.1} parent=11 // pred_check_branch
          %381 = sbr.rel (%p379) target = $region20
        $region19: #{tpu_custom_call.1} parent=11 // pred_region
          _
        $region20: #{tpu_custom_call.1} parent=11 // pred_fallthru
          _
        // Predicated region
        $region21: #{tpu_custom_call.1} parent=11 // pred_check
          %p382 = pneg %p173
        $region22: #{tpu_custom_call.1} parent=11 // pred_check_branch
          %384 = sbr.rel (%p382) target = $region24
        $region23: #{tpu_custom_call.1} parent=11 // pred_region
          _
        $region24: #{tpu_custom_call.1} parent=11 // pred_fallthru
          _
        // Predicated region
        $region25: #{tpu_custom_call.1} parent=11 // pred_check
          %p385 = pneg %p194
        $region26: #{tpu_custom_call.1} parent=11 // pred_check_branch
          %387 = sbr.rel (%p385) target = $region28
        $region27: #{tpu_custom_call.1} parent=11 // pred_region
          _
        $region28: #{tpu_custom_call.1} parent=11 // pred_fallthru
          _
        // Predicated region
        $region29: #{tpu_custom_call.1} parent=11 // pred_check
          %p388 = pneg %p215
        $region30: #{tpu_custom_call.1} parent=11 // pred_check_branch
          %390 = sbr.rel (%p388) target = $region32
        $region31: #{tpu_custom_call.1} parent=11 // pred_region
          _
        $region32: #{tpu_custom_call.1} parent=11 // pred_fallthru
          _
        // Predicated region
        $region33: #{tpu_custom_call.1} parent=11 // pred_check
          %p391 = pneg %p236
        $region34: #{tpu_custom_call.1} parent=11 // pred_check_branch
          %393 = sbr.rel (%p391) target = $region36
        $region35: #{tpu_custom_call.1} parent=11 // pred_region
          _
        $region36: #{tpu_custom_call.1} parent=11 // pred_fallthru
          _
      $region12: #{tpu_custom_call.1} parent=5 // pred_fallthru
        _
      %p394 = scmp.lt.s32.totalorder %s20, 4
      // Predicated region
      $region37: #{tpu_custom_call.1} parent=5 // pred_check
        %p395 = pneg %p394
      $region38: #{tpu_custom_call.1} parent=5 // pred_check_branch
        %397 = sbr.rel (%p395) target = $region40
      $region39: #{tpu_custom_call.1} parent=5 // pred_region
        // Predicated region
        $region41: #{tpu_custom_call.1} parent=39 // pred_check
          %p398 = pneg %p94
        $region42: #{tpu_custom_call.1} parent=39 // pred_check_branch
          %400 = sbr.rel (%p398) target = $region44
        $region43: #{tpu_custom_call.1} parent=39 // pred_region
          %s401 = smul.u32 16, %s28
          %p402 = scmp.lt.s32.totalorder %s401, 31
          %s403 = scalar_select %p402, %s401, 31
          %s404 = smul.addr %s403, 4
          %s405 = scalar_lea.vmem %s2, %s404
          %s406 = smul.u32 16, %s28
        $region44: #{tpu_custom_call.1} parent=39 // pred_fallthru
          _
        // Predicated region
        $region45: #{tpu_custom_call.1} parent=39 // pred_check
          %p407 = pneg %p120
        $region46: #{tpu_custom_call.1} parent=39 // pred_check_branch
          %409 = sbr.rel (%p407) target = $region48
        $region47: #{tpu_custom_call.1} parent=39 // pred_region
          %s410 = sand.u32 %s110, 1
          %s411 = sand.u32 %s110, 1
          %s412 = smul.addr %s411, 32
          %s413 = scalar_lea.vmem [#allocation4], %s412
          %s414 = smul.addr %s28, 4
          %s415 = scalar_lea.vmem %s3, %s414
          // Predicated region
          $region49: #{tpu_custom_call.1} parent=47 // pred_check
            _
          $region50: #{tpu_custom_call.1} parent=47 // pred_check_branch
            %417 = sbr.rel (0) target = $region52
          $region51: #{tpu_custom_call.1} parent=47 // pred_region
            // Predicated region
            $region53: #{tpu_custom_call.1} parent=51 // pred_check
              _
            $region54: #{tpu_custom_call.1} parent=51 // pred_check_branch
              %419 = sbr.rel target = $region56
            $region55: #{tpu_custom_call.1} parent=51 // pred_region
              // Predicated region
              $region68: #{tpu_custom_call.1} parent=55 // pred_check
                _
              $region69: #{tpu_custom_call.1} parent=55 // pred_check_branch
                %448 = sbr.rel (0) target = $region71
              $region70: #{tpu_custom_call.1} parent=55 // pred_region
                loop: start=0, step=1, limit=1
                $region72: #{tpu_custom_call.1} parent=70 // loop_pre_header
                  _
                $region73: #{tpu_custom_call.1} parent=70 // loop_header
                  %s450 = sphi 0, %s454
                  %p451 = scmp.ge.s32.totalorder %s450, 1
                  %s455 = sphi %s415, %s415
                  %s456 = sphi %s413, %s413
                $region74: #{tpu_custom_call.1} parent=70 // loop_header_branch
                  %453 = sbr.rel (%p451) target = $region78
                $region75: #{tpu_custom_call.1} parent=70 // loop_body
                  _
                $region76: #{tpu_custom_call.1} parent=70 // loop_footer
                  %s454 = sadd.s32 1, %s450
                $region77: #{tpu_custom_call.1} parent=70 // loop_footer_branch
                  %449 = sbr.rel target = $region73
                $region78: #{tpu_custom_call.1} parent=70 // loop_exit
                  _
                loop: start=0, step=1, limit=1
                $region79: #{tpu_custom_call.1} parent=70 // loop_pre_header
                  _
                $region80: #{tpu_custom_call.1} parent=70 // loop_header
                  %s459 = sphi 0, %s463
                  %p460 = scmp.ge.s32.totalorder %s459, 1
                  %s464 = sphi %s415, %s415
                  %s465 = sphi %s413, %s413
                $region81: #{tpu_custom_call.1} parent=70 // loop_header_branch
                  %462 = sbr.rel (%p460) target = $region85
                $region82: #{tpu_custom_call.1} parent=70 // loop_body
                  %v466 = vld [vmem:[%s464] sm:$0xf]
                  %467 = vst [vmem:[%s465] sm:$0xf] %v466
                  %v468 = vld [vmem:[%s464 + $0x8] sm:$0xf]
                  %469 = vst [vmem:[%s465 + $0x4] sm:$0xf] %v468
                  %v470 = vld [vmem:[%s464 + $0x10] sm:$0xf]
                  %471 = vst [vmem:[%s465 + $0x8] sm:$0xf] %v470
                  %v472 = vld [vmem:[%s464 + $0x18] sm:$0xf]
                  %473 = vst [vmem:[%s465 + $0xc] sm:$0xf] %v472
                  %v474 = vld [vmem:[%s464 + $0x20] sm:$0xf]
                  %475 = vst [vmem:[%s465 + $0x10] sm:$0xf] %v474
                  %v476 = vld [vmem:[%s464 + $0x28] sm:$0xf]
                  %477 = vst [vmem:[%s465 + $0x14] sm:$0xf] %v476
                  %v478 = vld [vmem:[%s464 + $0x30] sm:$0xf]
                  %479 = vst [vmem:[%s465 + $0x18] sm:$0xf] %v478
                  %v480 = vld [vmem:[%s464 + $0x38] sm:$0xf]
                  %481 = vst [vmem:[%s465 + $0x1c] sm:$0xf] %v480
                $region83: #{tpu_custom_call.1} parent=70 // loop_footer
                  %s463 = sadd.s32 1, %s459
                $region84: #{tpu_custom_call.1} parent=70 // loop_footer_branch
                  %458 = sbr.rel target = $region80
                $region85: #{tpu_custom_call.1} parent=70 // loop_exit
                  _
              $region71: #{tpu_custom_call.1} parent=55 // pred_fallthru
                _
            $region56: #{tpu_custom_call.1} parent=51 // pred_fallthru
              _
            // Predicated region
            $region57: #{tpu_custom_call.1} parent=51 // pred_check
              _
            $region58: #{tpu_custom_call.1} parent=51 // pred_check_branch
              %421 = sbr.rel (0) target = $region60
            $region59: #{tpu_custom_call.1} parent=51 // pred_region
              loop: start=0, step=1, limit=1
              $region61: #{tpu_custom_call.1} parent=59 // loop_pre_header
                _
              $region62: #{tpu_custom_call.1} parent=59 // loop_header
                %s424 = sphi 0, %s428
                %p425 = scmp.ge.s32.totalorder %s424, 1
                %s429 = sphi %s415, %s415
                %s430 = sphi %s413, %s413
              $region63: #{tpu_custom_call.1} parent=59 // loop_header_branch
                %427 = sbr.rel (%p425) target = $region67
              $region64: #{tpu_custom_call.1} parent=59 // loop_body
                %v431 = vld [vmem:[%s429] sm:$0xf]
                %432 = vst [vmem:[%s430] sm:$0xf] %v431
                %v433 = vld [vmem:[%s429 + $0x8] sm:$0xf]
                %434 = vst [vmem:[%s430 + $0x4] sm:$0xf] %v433
                %v435 = vld [vmem:[%s429 + $0x10] sm:$0xf]
                %436 = vst [vmem:[%s430 + $0x8] sm:$0xf] %v435
                %v437 = vld [vmem:[%s429 + $0x18] sm:$0xf]
                %438 = vst [vmem:[%s430 + $0xc] sm:$0xf] %v437
                %v439 = vld [vmem:[%s429 + $0x20] sm:$0xf]
                %440 = vst [vmem:[%s430 + $0x10] sm:$0xf] %v439
                %v441 = vld [vmem:[%s429 + $0x28] sm:$0xf]
                %442 = vst [vmem:[%s430 + $0x14] sm:$0xf] %v441
                %v443 = vld [vmem:[%s429 + $0x30] sm:$0xf]
                %444 = vst [vmem:[%s430 + $0x18] sm:$0xf] %v443
                %v445 = vld [vmem:[%s429 + $0x38] sm:$0xf]
                %446 = vst [vmem:[%s430 + $0x1c] sm:$0xf] %v445
              $region65: #{tpu_custom_call.1} parent=59 // loop_footer
                %s428 = sadd.s32 1, %s424
              $region66: #{tpu_custom_call.1} parent=59 // loop_footer_branch
                %423 = sbr.rel target = $region62
              $region67: #{tpu_custom_call.1} parent=59 // loop_exit
                _
            $region60: #{tpu_custom_call.1} parent=51 // pred_fallthru
              _
          $region52: #{tpu_custom_call.1} parent=47 // pred_fallthru
            _
          %482 = vnop
        $region48: #{tpu_custom_call.1} parent=39 // pred_fallthru
          _
        // Predicated region
        $region86: #{tpu_custom_call.1} parent=39 // pred_check
          %p483 = pneg %p146
        $region87: #{tpu_custom_call.1} parent=39 // pred_check_branch
          %485 = sbr.rel (%p483) target = $region89
        $region88: #{tpu_custom_call.1} parent=39 // pred_region
          %s486 = smul.u32 16, %s28
          %p487 = scmp.lt.s32.totalorder %s486, 31
          %s488 = scalar_select %p487, %s486, 31
          %s489 = smul.addr %s488, 8
          %s490 = scalar_lea.vmem %s4, %s489
          %s491 = smul.u32 16, %s28
        $region89: #{tpu_custom_call.1} parent=39 // pred_fallthru
          _
        // Predicated region
        $region90: #{tpu_custom_call.1} parent=39 // pred_check
          %p492 = pneg %p256
        $region91: #{tpu_custom_call.1} parent=39 // pred_check_branch
          %494 = sbr.rel (%p492) target = $region93
        $region92: #{tpu_custom_call.1} parent=39 // pred_region
          %p495 = scmp.lt.s32.totalorder %s27, 1
          %s496 = scalar_select %p495, %s27, 1
          %s497 = smul.addr %s496, 4
          %s498 = smul.addr %s497, 4
          %s499 = scalar_lea.vmem %s9, %s498
        $region93: #{tpu_custom_call.1} parent=39 // pred_fallthru
          _
        // Predicated region
        $region94: #{tpu_custom_call.1} parent=39 // pred_check
          %p500 = pneg %p282
        $region95: #{tpu_custom_call.1} parent=39 // pred_check_branch
          %502 = sbr.rel (%p500) target = $region97
        $region96: #{tpu_custom_call.1} parent=39 // pred_region
          %p503 = scmp.lt.s32.totalorder %s27, 1
          %s504 = scalar_select %p503, %s27, 1
          %s505 = scalar_lea.vmem %s10, %s504
        $region97: #{tpu_custom_call.1} parent=39 // pred_fallthru
          _
        // Predicated region
        $region98: #{tpu_custom_call.1} parent=39 // pred_check
          %p506 = pneg %p308
        $region99: #{tpu_custom_call.1} parent=39 // pred_check_branch
          %508 = sbr.rel (%p506) target = $region101
        $region100: #{tpu_custom_call.1} parent=39 // pred_region
          %p509 = scmp.lt.s32.totalorder %s27, 1
          %s510 = scalar_select %p509, %s27, 1
          %s511 = smul.addr %s510, 4
          %s512 = smul.addr %s511, 4
          %s513 = scalar_lea.vmem %s11, %s512
        $region101: #{tpu_custom_call.1} parent=39 // pred_fallthru
          _
        // Predicated region
        $region102: #{tpu_custom_call.1} parent=39 // pred_check
          %p514 = pneg %p334
        $region103: #{tpu_custom_call.1} parent=39 // pred_check_branch
          %516 = sbr.rel (%p514) target = $region105
        $region104: #{tpu_custom_call.1} parent=39 // pred_region
          %p517 = scmp.lt.s32.totalorder %s27, 1
          %s518 = scalar_select %p517, %s27, 1
          %s519 = scalar_lea.vmem %s12, %s518
        $region105: #{tpu_custom_call.1} parent=39 // pred_fallthru
          _
      $region40: #{tpu_custom_call.1} parent=5 // pred_fallthru
        _
      %p520 = scmp.le.s32.totalorder 1, %s20
      %p521 = scmp.lt.s32.totalorder %s20, 5
      %p522 = pnand %p520, %p521
      %p523 = pneg %p522
      // Predicated region
      $region106: #{tpu_custom_call.1} parent=5 // pred_check
        _
      $region107: #{tpu_custom_call.1} parent=5 // pred_check_branch
        %525 = sbr.rel (%p522) target = $region109
      $region108: #{tpu_custom_call.1} parent=5 // pred_region
        %s526 = ssub.s32 %s20, 1
        %s527 = sand.u32 %s113, 1
        %s528 = sand.u32 %s113, 1
        %s529 = smul.addr %s528, 32
        %s530 = scalar_lea.vmem [#allocation4], %s529
        // Predicated region
        $region110: #{tpu_custom_call.1} parent=108 // pred_check
          %p531 = pneg %p126
        $region111: #{tpu_custom_call.1} parent=108 // pred_check_branch
          %533 = sbr.rel (%p531) target = $region113
        $region112: #{tpu_custom_call.1} parent=108 // pred_region
          _
        $region113: #{tpu_custom_call.1} parent=108 // pred_fallthru
          _
        %p534 = pneg %p53
        %p535 = pneg %p50
        %p536 = pneg %p74
        %p537 = pneg %p71
        %s538 = smul.u32 16, %s30
        %p539 = scmp.lt.s32.totalorder %s538, 31
        %s540 = scalar_select %p539, %s538, 31
        %s541 = smul.addr %s540, 4
        %s542 = scalar_lea.vmem %s2, %s541
        %p543 = pneg %p100
        %p544 = pneg %p97
        %s545 = sand.u32 %s113, 1
        %s546 = sand.u32 %s113, 1
        %s547 = smul.addr %s546, 32
        %s548 = scalar_lea.vmem [#allocation4], %s547
        %p549 = pneg %p126
        %p550 = pneg %p123
        %s551 = smul.u32 16, %s30
        %p552 = scmp.lt.s32.totalorder %s551, 31
        %s553 = scalar_select %p552, %s551, 31
        %s554 = smul.addr %s553, 8
        %s555 = scalar_lea.vmem %s4, %s554
        %p556 = pneg %p152
        %p557 = pneg %p149
        %p558 = pneg %p173
        %p559 = pneg %p170
        %p560 = pneg %p194
        %p561 = pneg %p191
        %p562 = pneg %p215
        %p563 = pneg %p212
        %p564 = pneg %p236
        %p565 = pneg %p233
        %p566 = scmp.lt.s32.totalorder %s29, 1
        %s567 = scalar_select %p566, %s29, 1
        %s568 = smul.addr %s567, 4
        %s569 = smul.addr %s568, 4
        %s570 = scalar_lea.vmem %s9, %s569
        %p571 = pneg %p262
        %p572 = pneg %p259
        %p573 = scmp.lt.s32.totalorder %s29, 1
        %s574 = scalar_select %p573, %s29, 1
        %s575 = scalar_lea.vmem %s10, %s574
        %p576 = pneg %p288
        %p577 = pneg %p285
        %p578 = scmp.lt.s32.totalorder %s29, 1
        %s579 = scalar_select %p578, %s29, 1
        %s580 = smul.addr %s579, 4
        %s581 = smul.addr %s580, 4
        %s582 = scalar_lea.vmem %s11, %s581
        %p583 = pneg %p314
        %p584 = pneg %p311
        %p585 = scmp.lt.s32.totalorder %s29, 1
        %s586 = scalar_select %p585, %s29, 1
        %s587 = scalar_lea.vmem %s12, %s586
        %p588 = pneg %p340
        %p589 = pneg %p337
        %p590 = pneg %p361
        %p591 = pneg %p358
        %s592 = smul.u32 16, %s30
        %p593 = scmp.lt.s32.totalorder %s592, 31
        %s594 = scalar_select %p593, %s592, 31
        %s595 = smul.addr %s594, 4
        %s596 = scalar_lea.vmem %s2, %s595
        %s597 = smul.u32 16, %s30
        %s598 = smul.u32 16, %s30
        %p599 = scmp.lt.s32.totalorder %s598, 31
        %s600 = scalar_select %p599, %s598, 31
        %s601 = smul.addr %s600, 8
        %s602 = scalar_lea.vmem %s4, %s601
        %s603 = smul.u32 16, %s30
        %p604 = scmp.lt.s32.totalorder %s29, 1
        %s605 = scalar_select %p604, %s29, 1
        %s606 = smul.addr %s605, 4
        %s607 = smul.addr %s606, 4
        %s608 = scalar_lea.vmem %s9, %s607
        %p609 = scmp.lt.s32.totalorder %s29, 1
        %s610 = scalar_select %p609, %s29, 1
        %s611 = scalar_lea.vmem %s10, %s610
        %p612 = scmp.lt.s32.totalorder %s29, 1
        %s613 = scalar_select %p612, %s29, 1
        %s614 = smul.addr %s613, 4
        %s615 = smul.addr %s614, 4
        %s616 = scalar_lea.vmem %s11, %s615
        %p617 = scmp.lt.s32.totalorder %s29, 1
        %s618 = scalar_select %p617, %s29, 1
        %s619 = scalar_lea.vmem %s12, %s618
        %p621 = scmp.eq.s32.totalorder %s29, 0
        %p622 = scmp.eq.s32.totalorder %s30, 0
        %p623 = pnand %p621, %p622
        %p624 = pneg %p623
        // Predicated region
        $region114: #{tpu_custom_call.1} parent=108 // pred_check
          _
        $region115: #{tpu_custom_call.1} parent=108 // pred_check_branch
          %626 = sbr.rel (%p623) target = $region117
        $region116: #{tpu_custom_call.1} parent=108 // pred_region
          %v627 = vld [vmem:[%s0] sm:$0xff]
          %v628 = vld [vmem:[%s0 + $0x8] sm:$0xff]
          %v629 = vld [vmem:[%s0 + $0x10] sm:$0xff]
          %v630 = vld [vmem:[%s0 + $0x18] sm:$0xff]
          %v631 = vld [vmem:[%s0 + $0x20] sm:$0xff]
          %v632 = vld [vmem:[%s0 + $0x28] sm:$0xff]
          %v633 = vld [vmem:[%s0 + $0x30] sm:$0xff]
          %v634 = vld [vmem:[%s0 + $0x38] sm:$0xff]
          %v635 = vpack.c.bf16 %v628, %v627
          %v636 = vpack.c.bf16 %v630, %v629
          %v637 = vpack.c.bf16 %v632, %v631
          %v638 = vpack.c.bf16 %v634, %v633
          %v639 = vld [vmem:[%s5] sm:$0xf]
          %v640 = vld [vmem:[%s6] sm:$0x1]
          %v642 = vlaneseq
          %v643 = vshrl.u32 %v642, 7
          %v644 = vsub.s32 0, %v643
          %v645 = vrot.slane %v640, %v644
          %vm647 = vcmask 64512
          %v649 = vsel %vm647, %v635, 0
          %v652 = vsel %vm647, %v636, 0
          %v655 = vsel %vm647, %v637, 0
          %v658 = vsel %vm647, %v638, 0
          %vm660 = vcmask 1043456
          %v662 = vsel %vm660, %v639, 0
          %664 = vmatprep.subr.bf16.mxu0 0
          %665 = vmatpush1.bf16.msra.mxu0 %v662
          %666 = vmatprep.subr.bf16.mxu0 0
          %667 = vmatpush1.bf16.msra.mxu0 0
          %668 = vmatprep.subr.bf16.mxu0 0
          %669 = vmatpush1.bf16.msra.mxu0 0
          %670 = vmatprep.subr.bf16.mxu0 0
          %671 = vmatpush1.bf16.msra.mxu0 0
          %672 = vmatprep.subr.bf16.mxu0 0
          %673 = vmatpush1.bf16.msra.mxu0 0
          %674 = vmatprep.subr.bf16.mxu0 0
          %675 = vmatpush1.bf16.msra.mxu0 0
          %676 = vmatprep.subr.bf16.mxu0 0
          %677 = vmatpush1.bf16.msra.mxu0 0
          %678 = vmatprep.subr.bf16.mxu0 0
          %679 = vmatpush1.bf16.msra.mxu0 0
          %680 = vmatprep.subr.bf16.mxu0 0
          %681 = vmatpush1.bf16.msra.mxu0 0
          %682 = vmatprep.subr.bf16.mxu0 0
          %683 = vmatpush1.bf16.msra.mxu0 0
          %684 = vmatprep.subr.bf16.mxu0 0
          %685 = vmatpush1.bf16.msra.mxu0 0
          %686 = vmatprep.subr.bf16.mxu0 0
          %687 = vmatpush1.bf16.msra.mxu0 0
          %688 = vmatprep.subr.bf16.mxu0 0
          %689 = vmatpush1.bf16.msra.mxu0 0
          %690 = vmatprep.subr.bf16.mxu0 0
          %691 = vmatpush1.bf16.msra.mxu0 0
          %692 = vmatprep.subr.bf16.mxu0 0
          %693 = vmatpush1.bf16.msra.mxu0 0
          %694 = vmatprep.subr.bf16.mxu0 0
          %695 = vmatpush1.bf16.msra.mxu0 0
          %696 = vmatprep.mubr.bf16.mxu0 0
          %697 = vmatmul.mubr.bf16.gmra.mrb[0].mxu0 %v649
          %v698 = vpop.f32.mrb[0].mxu0
          %v699 = vadd.f32 %v645, %v698
          %v700 = vpop.f32.mrb[0].mxu0
          %v701 = vpop.f32.mrb[0].mxu0
          %v702 = vadd.f32 %v645, %v701
          %v703 = vpop.f32.mrb[0].mxu0
          %704 = vmatprep.mubr.bf16.mxu0 0
          %705 = vmatmul.mubr.bf16.gmra.mrb[0].mxu0 %v652
          %v706 = vpop.f32.mrb[0].mxu0
          %v707 = vadd.f32 %v645, %v706
          %v708 = vpop.f32.mrb[0].mxu0
          %v709 = vpop.f32.mrb[0].mxu0
          %v710 = vadd.f32 %v645, %v709
          %v711 = vpop.f32.mrb[0].mxu0
          %712 = vmatprep.mubr.bf16.mxu0 0
          %713 = vmatmul.mubr.bf16.gmra.mrb[0].mxu0 %v655
          %v714 = vpop.f32.mrb[0].mxu0
          %v715 = vadd.f32 %v645, %v714
          %v716 = vpop.f32.mrb[0].mxu0
          %v717 = vpop.f32.mrb[0].mxu0
          %v718 = vadd.f32 %v645, %v717
          %v719 = vpop.f32.mrb[0].mxu0
          %720 = vmatprep.mubr.bf16.mxu0 0
          %721 = vmatmul.mubr.bf16.gmra.mrb[0].mxu0 %v658
          %v722 = vpop.f32.mrb[0].mxu0
          %v723 = vadd.f32 %v645, %v722
          %v724 = vpop.f32.mrb[0].mxu0
          %v725 = vpop.f32.mrb[0].mxu0
          %v726 = vadd.f32 %v645, %v725
          %v727 = vpop.f32.mrb[0].mxu0
          %728 = vdwg.mxu0
          %vm729 = vcmask 261120
          %730 = vst.msk [vmem:[#allocation2] sm:$0xff] %vm729, %v699
          %731 = vst.msk [vmem:[#allocation2 + $0x8] sm:$0xff] %vm729, %v702
          %732 = vst.msk [vmem:[#allocation2 + $0x10] sm:$0xff] %vm729, %v707
          %733 = vst.msk [vmem:[#allocation2 + $0x18] sm:$0xff] %vm729, %v710
          %734 = vst.msk [vmem:[#allocation2 + $0x20] sm:$0xff] %vm729, %v715
          %735 = vst.msk [vmem:[#allocation2 + $0x28] sm:$0xff] %vm729, %v718
          %736 = vst.msk [vmem:[#allocation2 + $0x30] sm:$0xff] %vm729, %v723
          %737 = vst.msk [vmem:[#allocation2 + $0x38] sm:$0xff] %vm729, %v726
        $region117: #{tpu_custom_call.1} parent=108 // pred_fallthru
          _
        // Predicated region
        $region118: #{tpu_custom_call.1} parent=108 // pred_check
          %p738 = pneg %p622
        $region119: #{tpu_custom_call.1} parent=108 // pred_check_branch
          %740 = sbr.rel (%p738) target = $region121
        $region120: #{tpu_custom_call.1} parent=108 // pred_region
          %vm741 = vcmask 261120
          %742 = vst.msk [vmem:[#allocation3] sm:$0xff] %vm741, 0.0
          %743 = vst.msk [vmem:[#allocation3 + $0x8] sm:$0xff] %vm741, 0.0
          %744 = vst.msk [vmem:[#allocation3 + $0x10] sm:$0xff] %vm741, 0.0
          %745 = vst.msk [vmem:[#allocation3 + $0x18] sm:$0xff] %vm741, 0.0
          %746 = vst.msk [vmem:[#allocation3 + $0x20] sm:$0xff] %vm741, 0.0
          %747 = vst.msk [vmem:[#allocation3 + $0x28] sm:$0xff] %vm741, 0.0
          %748 = vst.msk [vmem:[#allocation3 + $0x30] sm:$0xff] %vm741, 0.0
          %749 = vst.msk [vmem:[#allocation3 + $0x38] sm:$0xff] %vm741, 0.0
        $region121: #{tpu_custom_call.1} parent=108 // pred_fallthru
          _
        %v750 = vld [vmem:[#allocation2] sm:$0xff]
        %v751 = vld [vmem:[#allocation2 + $0x8] sm:$0xff]
        %v752 = vld [vmem:[#allocation2 + $0x10] sm:$0xff]
        %v753 = vld [vmem:[#allocation2 + $0x18] sm:$0xff]
        %v754 = vld [vmem:[#allocation2 + $0x20] sm:$0xff]
        %v755 = vld [vmem:[#allocation2 + $0x28] sm:$0xff]
        %v756 = vld [vmem:[#allocation2 + $0x30] sm:$0xff]
        %v757 = vld [vmem:[#allocation2 + $0x38] sm:$0xff]
        %v758 = vpack.c.bf16 %v751, %v750
        %v759 = vpack.c.bf16 %v753, %v752
        %v760 = vpack.c.bf16 %v755, %v754
        %v761 = vpack.c.bf16 %v757, %v756
        %v762 = vld [vmem:[%s596] sm:$0xf]
        %v763 = vld [vmem:[%s596 + $0x4] sm:$0xf]
        %v764 = vld [vmem:[%s596 + $0x8] sm:$0xf]
        %v765 = vld [vmem:[%s596 + $0xc] sm:$0xf]
        %v766 = vld [vmem:[%s596 + $0x10] sm:$0xf]
        %v767 = vld [vmem:[%s596 + $0x14] sm:$0xf]
        %v768 = vld [vmem:[%s596 + $0x18] sm:$0xf]
        %v769 = vld [vmem:[%s596 + $0x1c] sm:$0xf]
        %v770 = vld [vmem:[%s596 + $0x20] sm:$0xf]
        %v771 = vld [vmem:[%s596 + $0x24] sm:$0xf]
        %v772 = vld [vmem:[%s596 + $0x28] sm:$0xf]
        %v773 = vld [vmem:[%s596 + $0x2c] sm:$0xf]
        %v774 = vld [vmem:[%s596 + $0x30] sm:$0xf]
        %v775 = vld [vmem:[%s596 + $0x34] sm:$0xf]
        %v776 = vld [vmem:[%s596 + $0x38] sm:$0xf]
        %v777 = vld [vmem:[%s596 + $0x3c] sm:$0xf]
        %v778 = vld [vmem:[%s602] sm:$0xff]
        %v779 = vld [vmem:[%s602 + $0x8] sm:$0xff]
        %v780 = vld [vmem:[%s602 + $0x10] sm:$0xff]
        %v781 = vld [vmem:[%s602 + $0x18] sm:$0xff]
        %v782 = vld [vmem:[%s602 + $0x20] sm:$0xff]
        %v783 = vld [vmem:[%s602 + $0x28] sm:$0xff]
        %v784 = vld [vmem:[%s602 + $0x30] sm:$0xff]
        %v785 = vld [vmem:[%s602 + $0x38] sm:$0xff]
        %v786 = vld [vmem:[%s602 + $0x40] sm:$0xff]
        %v787 = vld [vmem:[%s602 + $0x48] sm:$0xff]
        %v788 = vld [vmem:[%s602 + $0x50] sm:$0xff]
        %v789 = vld [vmem:[%s602 + $0x58] sm:$0xff]
        %v790 = vld [vmem:[%s602 + $0x60] sm:$0xff]
        %v791 = vld [vmem:[%s602 + $0x68] sm:$0xff]
        %v792 = vld [vmem:[%s602 + $0x70] sm:$0xff]
        %v793 = vld [vmem:[%s602 + $0x78] sm:$0xff]
        %v794 = vpack.c.bf16 %v779, %v778
        %v795 = vpack.c.bf16 %v781, %v780
        %v796 = vpack.c.bf16 %v783, %v782
        %v797 = vpack.c.bf16 %v785, %v784
        %v798 = vpack.c.bf16 %v787, %v786
        %v799 = vpack.c.bf16 %v789, %v788
        %v800 = vpack.c.bf16 %v791, %v790
        %v801 = vpack.c.bf16 %v793, %v792
        %v802 = vld [vmem:[%s7] sm:$0x3]
        %v803 = vld [vmem:[%s8] sm:$0x1]
        %v805 = vlaneseq
        %v806 = vshrl.u32 %v805, 7
        %v807 = vsub.s32 0, %v806
        %v808 = vrot.slane %v803, %v807
        %vm810 = vcmask 31744
        %v812 = vsel %vm810, %v794, 0
        %v815 = vsel %vm810, %v795, 0
        %v818 = vsel %vm810, %v796, 0
        %v821 = vsel %vm810, %v797, 0
        %v824 = vsel %vm810, %v798, 0
        %v827 = vsel %vm810, %v799, 0
        %v830 = vsel %vm810, %v800, 0
        %v833 = vsel %vm810, %v801, 0
        %vm835 = vcmask 1041408
        %v837 = vsel %vm835, %v802, 0
        %839 = vmatprep.subr.bf16.mxu0 0
        %840 = vmatpush1.bf16.msra.mxu0 %v837
        %841 = vmatprep.subr.bf16.mxu0 0
        %842 = vmatpush1.bf16.msra.mxu0 0
        %843 = vmatprep.subr.bf16.mxu0 0
        %844 = vmatpush1.bf16.msra.mxu0 0
        %845 = vmatprep.subr.bf16.mxu0 0
        %846 = vmatpush1.bf16.msra.mxu0 0
        %847 = vmatprep.subr.bf16.mxu0 0
        %848 = vmatpush1.bf16.msra.mxu0 0
        %849 = vmatprep.subr.bf16.mxu0 0
        %850 = vmatpush1.bf16.msra.mxu0 0
        %851 = vmatprep.subr.bf16.mxu0 0
        %852 = vmatpush1.bf16.msra.mxu0 0
        %853 = vmatprep.subr.bf16.mxu0 0
        %854 = vmatpush1.bf16.msra.mxu0 0
        %855 = vmatprep.subr.bf16.mxu0 0
        %856 = vmatpush1.bf16.msra.mxu0 0
        %857 = vmatprep.subr.bf16.mxu0 0
        %858 = vmatpush1.bf16.msra.mxu0 0
        %859 = vmatprep.subr.bf16.mxu0 0
        %860 = vmatpush1.bf16.msra.mxu0 0
        %861 = vmatprep.subr.bf16.mxu0 0
        %862 = vmatpush1.bf16.msra.mxu0 0
        %863 = vmatprep.subr.bf16.mxu0 0
        %864 = vmatpush1.bf16.msra.mxu0 0
        %865 = vmatprep.subr.bf16.mxu0 0
        %866 = vmatpush1.bf16.msra.mxu0 0
        %867 = vmatprep.subr.bf16.mxu0 0
        %868 = vmatpush1.bf16.msra.mxu0 0
        %869 = vmatprep.subr.bf16.mxu0 0
        %870 = vmatpush1.bf16.msra.mxu0 0
        %871 = vmatprep.mubr.bf16.mxu0 0
        %872 = vmatmul.mubr.bf16.gmra.mrb[0].mxu0 %v812
        %v873 = vpop.f32.mrb[0].mxu0
        %v874 = vadd.f32 %v808, %v873
        %v875 = vpop.f32.mrb[0].mxu0
        %v876 = vpop.f32.mrb[0].mxu0
        %v877 = vadd.f32 %v808, %v876
        %v878 = vpop.f32.mrb[0].mxu0
        %879 = vmatprep.mubr.bf16.mxu0 0
        %880 = vmatmul.mubr.bf16.gmra.mrb[0].mxu0 %v815
        %v881 = vpop.f32.mrb[0].mxu0
        %v882 = vadd.f32 %v808, %v881
        %v883 = vpop.f32.mrb[0].mxu0
        %v884 = vpop.f32.mrb[0].mxu0
        %v885 = vadd.f32 %v808, %v884
        %v886 = vpop.f32.mrb[0].mxu0
        %887 = vmatprep.mubr.bf16.mxu0 0
        %888 = vmatmul.mubr.bf16.gmra.mrb[0].mxu0 %v818
        %v889 = vpop.f32.mrb[0].mxu0
        %v890 = vadd.f32 %v808, %v889
        %v891 = vpop.f32.mrb[0].mxu0
        %v892 = vpop.f32.mrb[0].mxu0
        %v893 = vadd.f32 %v808, %v892
        %v894 = vpop.f32.mrb[0].mxu0
        %895 = vmatprep.mubr.bf16.mxu0 0
        %896 = vmatmul.mubr.bf16.gmra.mrb[0].mxu0 %v821
        %v897 = vpop.f32.mrb[0].mxu0
        %v898 = vadd.f32 %v808, %v897
        %v899 = vpop.f32.mrb[0].mxu0
        %v900 = vpop.f32.mrb[0].mxu0
        %v901 = vadd.f32 %v808, %v900
        %v902 = vpop.f32.mrb[0].mxu0
        %903 = vmatprep.mubr.bf16.mxu0 0
        %904 = vmatmul.mubr.bf16.gmra.mrb[0].mxu0 %v824
        %v905 = vpop.f32.mrb[0].mxu0
        %v906 = vadd.f32 %v808, %v905
        %v907 = vpop.f32.mrb[0].mxu0
        %v908 = vpop.f32.mrb[0].mxu0
        %v909 = vadd.f32 %v808, %v908
        %v910 = vpop.f32.mrb[0].mxu0
        %911 = vmatprep.mubr.bf16.mxu0 0
        %912 = vmatmul.mubr.bf16.gmra.mrb[0].mxu0 %v827
        %v913 = vpop.f32.mrb[0].mxu0
        %v914 = vadd.f32 %v808, %v913
        %v915 = vpop.f32.mrb[0].mxu0
        %v916 = vpop.f32.mrb[0].mxu0
        %v917 = vadd.f32 %v808, %v916
        %v918 = vpop.f32.mrb[0].mxu0
        %919 = vmatprep.mubr.bf16.mxu0 0
        %920 = vmatmul.mubr.bf16.gmra.mrb[0].mxu0 %v830
        %v921 = vpop.f32.mrb[0].mxu0
        %v922 = vadd.f32 %v808, %v921
        %v923 = vpop.f32.mrb[0].mxu0
        %v924 = vpop.f32.mrb[0].mxu0
        %v925 = vadd.f32 %v808, %v924
        %v926 = vpop.f32.mrb[0].mxu0
        %927 = vmatprep.mubr.bf16.mxu0 0
        %928 = vmatmul.mubr.bf16.gmra.mrb[0].mxu0 %v833
        %v929 = vpop.f32.mrb[0].mxu0
        %v930 = vadd.f32 %v808, %v929
        %v931 = vpop.f32.mrb[0].mxu0
        %v932 = vpop.f32.mrb[0].mxu0
        %v933 = vadd.f32 %v808, %v932
        %v934 = vpop.f32.mrb[0].mxu0
        %935 = vdwg.mxu0
        %v952 = vunpack.c.l.b16 %v762
        %v953 = vunpack.c.l.b16 %v763
        %v954 = vunpack.c.l.b16 %v764
        %v955 = vunpack.c.l.b16 %v765
        %v956 = vunpack.c.l.b16 %v766
        %v957 = vunpack.c.l.b16 %v767
        %v958 = vunpack.c.l.b16 %v768
        %v959 = vunpack.c.l.b16 %v769
        %v960 = vunpack.c.l.b16 %v770
        %v961 = vunpack.c.l.b16 %v771
        %v962 = vunpack.c.l.b16 %v772
        %v963 = vunpack.c.l.b16 %v773
        %v964 = vunpack.c.l.b16 %v774
        %v965 = vunpack.c.l.b16 %v775
        %v966 = vunpack.c.l.b16 %v776
        %v967 = vunpack.c.l.b16 %v777
        %v968 = vpack.c.b16 %v953, %v952
        %v969 = vpack.c.b16 %v955, %v954
        %v970 = vpack.c.b16 %v957, %v956
        %v971 = vpack.c.b16 %v959, %v958
        %v972 = vpack.c.b16 %v961, %v960
        %v973 = vpack.c.b16 %v963, %v962
        %v974 = vpack.c.b16 %v965, %v964
        %v975 = vpack.c.b16 %v967, %v966
        %vm976 = vcmask 523264
        %v978 = vsel %vm976, %v968, 0
        %v981 = vsel %vm976, %v969, 0
        %v984 = vsel %vm976, %v970, 0
        %v987 = vsel %vm976, %v971, 0
        %v990 = vsel %vm976, %v972, 0
        %v993 = vsel %vm976, %v973, 0
        %v996 = vsel %vm976, %v974, 0
        %v999 = vsel %vm976, %v975, 0
        %1001 = vmatprep.subr.bf16.mxu0 0
        %1002 = vmatpush1.bf16.msra.mxu0 %v758
        %1003 = vmatprep.subr.bf16.mxu0 0
        %1004 = vmatpush1.bf16.msra.mxu0 %v759
        %1005 = vmatprep.subr.bf16.mxu0 0
        %1006 = vmatpush1.bf16.msra.mxu0 %v760
        %1007 = vmatprep.subr.bf16.mxu0 0
        %1008 = vmatpush1.bf16.msra.mxu0 %v761
        %1009 = vmatprep.subr.bf16.mxu0 0
        %1010 = vmatpush1.bf16.msra.mxu0 0
        %1011 = vmatprep.subr.bf16.mxu0 0
        %1012 = vmatpush1.bf16.msra.mxu0 0
        %1013 = vmatprep.subr.bf16.mxu0 0
        %1014 = vmatpush1.bf16.msra.mxu0 0
        %1015 = vmatprep.subr.bf16.mxu0 0
        %1016 = vmatpush1.bf16.msra.mxu0 0
        %1017 = vmatprep.subr.bf16.mxu0 0
        %1018 = vmatpush1.bf16.msra.mxu0 0
        %1019 = vmatprep.subr.bf16.mxu0 0
        %1020 = vmatpush1.bf16.msra.mxu0 0
        %1021 = vmatprep.subr.bf16.mxu0 0
        %1022 = vmatpush1.bf16.msra.mxu0 0
        %1023 = vmatprep.subr.bf16.mxu0 0
        %1024 = vmatpush1.bf16.msra.mxu0 0
        %1025 = vmatprep.subr.bf16.mxu0 0
        %1026 = vmatpush1.bf16.msra.mxu0 0
        %1027 = vmatprep.subr.bf16.mxu0 0
        %1028 = vmatpush1.bf16.msra.mxu0 0
        %1029 = vmatprep.subr.bf16.mxu0 0
        %1030 = vmatpush1.bf16.msra.mxu0 0
        %1031 = vmatprep.subr.bf16.mxu0 0
        %1032 = vmatpush1.bf16.msra.mxu0 0
        %1033 = vmatprep.mubr.bf16.mxu0 0
        %1034 = vmatmul.mubr.bf16.gmra.mrb[0].mxu0 %v978
        %v1035 = vpop.f32.mrb[0].mxu0
        %v1036 = vadd.f32 %v874, %v1035
        %v1037 = vpop.f32.mrb[0].mxu0
        %v1038 = vpop.f32.mrb[0].mxu0
        %v1039 = vadd.f32 %v877, %v1038
        %v1040 = vpop.f32.mrb[0].mxu0
        %1041 = vmatprep.mubr.bf16.mxu0 0
        %1042 = vmatmul.mubr.bf16.gmra.mrb[0].mxu0 %v981
        %v1043 = vpop.f32.mrb[0].mxu0
        %v1044 = vadd.f32 %v882, %v1043
        %v1045 = vpop.f32.mrb[0].mxu0
        %v1046 = vpop.f32.mrb[0].mxu0
        %v1047 = vadd.f32 %v885, %v1046
        %v1048 = vpop.f32.mrb[0].mxu0
        %1049 = vmatprep.mubr.bf16.mxu0 0
        %1050 = vmatmul.mubr.bf16.gmra.mrb[0].mxu0 %v984
        %v1051 = vpop.f32.mrb[0].mxu0
        %v1052 = vadd.f32 %v890, %v1051
        %v1053 = vpop.f32.mrb[0].mxu0
        %v1054 = vpop.f32.mrb[0].mxu0
        %v1055 = vadd.f32 %v893, %v1054
        %v1056 = vpop.f32.mrb[0].mxu0
        %1057 = vmatprep.mubr.bf16.mxu0 0
        %1058 = vmatmul.mubr.bf16.gmra.mrb[0].mxu0 %v987
        %v1059 = vpop.f32.mrb[0].mxu0
        %v1060 = vadd.f32 %v898, %v1059
        %v1061 = vpop.f32.mrb[0].mxu0
        %v1062 = vpop.f32.mrb[0].mxu0
        %v1063 = vadd.f32 %v901, %v1062
        %v1064 = vpop.f32.mrb[0].mxu0
        %1065 = vmatprep.mubr.bf16.mxu0 0
        %1066 = vmatmul.mubr.bf16.gmra.mrb[0].mxu0 %v990
        %v1067 = vpop.f32.mrb[0].mxu0
        %v1068 = vadd.f32 %v906, %v1067
        %v1069 = vpop.f32.mrb[0].mxu0
        %v1070 = vpop.f32.mrb[0].mxu0
        %v1071 = vadd.f32 %v909, %v1070
        %v1072 = vpop.f32.mrb[0].mxu0
        %1073 = vmatprep.mubr.bf16.mxu0 0
        %1074 = vmatmul.mubr.bf16.gmra.mrb[0].mxu0 %v993
        %v1075 = vpop.f32.mrb[0].mxu0
        %v1076 = vadd.f32 %v914, %v1075
        %v1077 = vpop.f32.mrb[0].mxu0
        %v1078 = vpop.f32.mrb[0].mxu0
        %v1079 = vadd.f32 %v917, %v1078
        %v1080 = vpop.f32.mrb[0].mxu0
        %1081 = vmatprep.mubr.bf16.mxu0 0
        %1082 = vmatmul.mubr.bf16.gmra.mrb[0].mxu0 %v996
        %v1083 = vpop.f32.mrb[0].mxu0
        %v1084 = vadd.f32 %v922, %v1083
        %v1085 = vpop.f32.mrb[0].mxu0
        %v1086 = vpop.f32.mrb[0].mxu0
        %v1087 = vadd.f32 %v925, %v1086
        %v1088 = vpop.f32.mrb[0].mxu0
        %1089 = vmatprep.mubr.bf16.mxu0 0
        %1090 = vmatmul.mubr.bf16.gmra.mrb[0].mxu0 %v999
        %v1091 = vpop.f32.mrb[0].mxu0
        %v1092 = vadd.f32 %v930, %v1091
        %v1093 = vpop.f32.mrb[0].mxu0
        %v1094 = vpop.f32.mrb[0].mxu0
        %v1095 = vadd.f32 %v933, %v1094
        %v1096 = vpop.f32.mrb[0].mxu0
        %1097 = vdwg.mxu0
        %v1098 = vmax.f32 %v1036, 0.0
        %v1099 = vmax.f32 %v1039, 0.0
        %v1100 = vmax.f32 %v1044, 0.0
        %v1101 = vmax.f32 %v1047, 0.0
        %v1102 = vmax.f32 %v1052, 0.0
        %v1103 = vmax.f32 %v1055, 0.0
        %v1104 = vmax.f32 %v1060, 0.0
        %v1105 = vmax.f32 %v1063, 0.0
        %v1106 = vmax.f32 %v1068, 0.0
        %v1107 = vmax.f32 %v1071, 0.0
        %v1108 = vmax.f32 %v1076, 0.0
        %v1109 = vmax.f32 %v1079, 0.0
        %v1110 = vmax.f32 %v1084, 0.0
        %v1111 = vmax.f32 %v1087, 0.0
        %v1112 = vmax.f32 %v1092, 0.0
        %v1113 = vmax.f32 %v1095, 0.0
        %v1114 = vpack.c.bf16 %v1099, %v1098
        %v1115 = vpack.c.bf16 %v1101, %v1100
        %v1116 = vpack.c.bf16 %v1103, %v1102
        %v1117 = vpack.c.bf16 %v1105, %v1104
        %v1118 = vpack.c.bf16 %v1107, %v1106
        %v1119 = vpack.c.bf16 %v1109, %v1108
        %v1120 = vpack.c.bf16 %v1111, %v1110
        %v1121 = vpack.c.bf16 %v1113, %v1112
        %v1122 = vld [vmem:[#allocation3] sm:$0xff]
        %v1123 = vld [vmem:[#allocation3 + $0x8] sm:$0xff]
        %v1124 = vld [vmem:[#allocation3 + $0x10] sm:$0xff]
        %v1125 = vld [vmem:[#allocation3 + $0x18] sm:$0xff]
        %v1126 = vld [vmem:[#allocation3 + $0x20] sm:$0xff]
        %v1127 = vld [vmem:[#allocation3 + $0x28] sm:$0xff]
        %v1128 = vld [vmem:[#allocation3 + $0x30] sm:$0xff]
        %v1129 = vld [vmem:[#allocation3 + $0x38] sm:$0xff]
        %v1130 = vld [vmem:[%s530] sm:$0xf]
        %v1131 = vld [vmem:[%s530 + $0x4] sm:$0xf]
        %v1132 = vld [vmem:[%s530 + $0x8] sm:$0xf]
        %v1133 = vld [vmem:[%s530 + $0xc] sm:$0xf]
        %v1134 = vld [vmem:[%s530 + $0x10] sm:$0xf]
        %v1135 = vld [vmem:[%s530 + $0x14] sm:$0xf]
        %v1136 = vld [vmem:[%s530 + $0x18] sm:$0xf]
        %v1137 = vld [vmem:[%s530 + $0x1c] sm:$0xf]
        %v1146 = vunpack.c.l.b16 %v1130
        %v1147 = vunpack.c.l.b16 %v1131
        %v1148 = vunpack.c.l.b16 %v1132
        %v1149 = vunpack.c.l.b16 %v1133
        %v1150 = vunpack.c.l.b16 %v1134
        %v1151 = vunpack.c.l.b16 %v1135
        %v1152 = vunpack.c.l.b16 %v1136
        %v1153 = vunpack.c.l.b16 %v1137
        %v1154 = vpack.c.b16 %v1147, %v1146
        %v1155 = vpack.c.b16 %v1149, %v1148
        %v1156 = vpack.c.b16 %v1151, %v1150
        %v1157 = vpack.c.b16 %v1153, %v1152
        %1162 = vmatprep.subr.bf16.mxu0 0
        %1163 = vmatpush1.bf16.msra.mxu0 %v1114
        %1164 = vmatprep.subr.bf16.mxu0 0
        %1165 = vmatpush1.bf16.msra.mxu0 %v1115
        %1166 = vmatprep.subr.bf16.mxu0 0
        %1167 = vmatpush1.bf16.msra.mxu0 %v1116
        %1168 = vmatprep.subr.bf16.mxu0 0
        %1169 = vmatpush1.bf16.msra.mxu0 %v1117
        %1170 = vmatprep.subr.bf16.mxu0 0
        %1171 = vmatpush1.bf16.msra.mxu0 %v1118
        %1172 = vmatprep.subr.bf16.mxu0 0
        %1173 = vmatpush1.bf16.msra.mxu0 %v1119
        %1174 = vmatprep.subr.bf16.mxu0 0
        %1175 = vmatpush1.bf16.msra.mxu0 %v1120
        %1176 = vmatprep.subr.bf16.mxu0 0
        %1177 = vmatpush1.bf16.msra.mxu0 %v1121
        %1178 = vmatprep.subr.bf16.mxu0 0
        %1179 = vmatpush1.bf16.msra.mxu0 0
        %1180 = vmatprep.subr.bf16.mxu0 0
        %1181 = vmatpush1.bf16.msra.mxu0 0
        %1182 = vmatprep.subr.bf16.mxu0 0
        %1183 = vmatpush1.bf16.msra.mxu0 0
        %1184 = vmatprep.subr.bf16.mxu0 0
        %1185 = vmatpush1.bf16.msra.mxu0 0
        %1186 = vmatprep.subr.bf16.mxu0 0
        %1187 = vmatpush1.bf16.msra.mxu0 0
        %1188 = vmatprep.subr.bf16.mxu0 0
        %1189 = vmatpush1.bf16.msra.mxu0 0
        %1190 = vmatprep.subr.bf16.mxu0 0
        %1191 = vmatpush1.bf16.msra.mxu0 0
        %1192 = vmatprep.subr.bf16.mxu0 0
        %1193 = vmatpush1.bf16.msra.mxu0 0
        %1194 = vmatprep.mubr.bf16.mxu0 0
        %1195 = vmatmul.mubr.bf16.gmra.mrb[0].mxu0 %v1154
        %v1196 = vpop.f32.mrb[0].mxu0
        %v1197 = vadd.f32 0.0, %v1196
        %v1198 = vpop.f32.mrb[0].mxu0
        %v1199 = vpop.f32.mrb[0].mxu0
        %v1200 = vadd.f32 0.0, %v1199
        %v1201 = vpop.f32.mrb[0].mxu0
        %1202 = vmatprep.mubr.bf16.mxu0 0
        %1203 = vmatmul.mubr.bf16.gmra.mrb[0].mxu0 %v1155
        %v1204 = vpop.f32.mrb[0].mxu0
        %v1205 = vadd.f32 0.0, %v1204
        %v1206 = vpop.f32.mrb[0].mxu0
        %v1207 = vpop.f32.mrb[0].mxu0
        %v1208 = vadd.f32 0.0, %v1207
        %v1209 = vpop.f32.mrb[0].mxu0
        %1210 = vmatprep.mubr.bf16.mxu0 0
        %1211 = vmatmul.mubr.bf16.gmra.mrb[0].mxu0 %v1156
        %v1212 = vpop.f32.mrb[0].mxu0
        %v1213 = vadd.f32 0.0, %v1212
        %v1214 = vpop.f32.mrb[0].mxu0
        %v1215 = vpop.f32.mrb[0].mxu0
        %v1216 = vadd.f32 0.0, %v1215
        %v1217 = vpop.f32.mrb[0].mxu0
        %1218 = vmatprep.mubr.bf16.mxu0 0
        %1219 = vmatmul.mubr.bf16.gmra.mrb[0].mxu0 %v1157
        %v1220 = vpop.f32.mrb[0].mxu0
        %v1221 = vadd.f32 0.0, %v1220
        %v1222 = vpop.f32.mrb[0].mxu0
        %v1223 = vpop.f32.mrb[0].mxu0
        %v1224 = vadd.f32 0.0, %v1223
        %v1225 = vpop.f32.mrb[0].mxu0
        %1226 = vdwg.mxu0
        %v1227 = vadd.f32 %v1122, %v1197
        %v1228 = vadd.f32 %v1123, %v1200
        %v1229 = vadd.f32 %v1124, %v1205
        %v1230 = vadd.f32 %v1125, %v1208
        %v1231 = vadd.f32 %v1126, %v1213
        %v1232 = vadd.f32 %v1127, %v1216
        %v1233 = vadd.f32 %v1128, %v1221
        %v1234 = vadd.f32 %v1129, %v1224
        %vm1235 = vcmask 261120
        %1236 = vst.msk [vmem:[#allocation3] sm:$0xff] %vm1235, %v1227
        %1237 = vst.msk [vmem:[#allocation3 + $0x8] sm:$0xff] %vm1235, %v1228
        %1238 = vst.msk [vmem:[#allocation3 + $0x10] sm:$0xff] %vm1235, %v1229
        %1239 = vst.msk [vmem:[#allocation3 + $0x18] sm:$0xff] %vm1235, %v1230
        %1240 = vst.msk [vmem:[#allocation3 + $0x20] sm:$0xff] %vm1235, %v1231
        %1241 = vst.msk [vmem:[#allocation3 + $0x28] sm:$0xff] %vm1235, %v1232
        %1242 = vst.msk [vmem:[#allocation3 + $0x30] sm:$0xff] %vm1235, %v1233
        %1243 = vst.msk [vmem:[#allocation3 + $0x38] sm:$0xff] %vm1235, %v1234
        %p1244 = scmp.eq.s32.totalorder %s30, 1
        // Predicated region
        $region122: #{tpu_custom_call.1} parent=108 // pred_check
          %p1245 = pneg %p1244
        $region123: #{tpu_custom_call.1} parent=108 // pred_check_branch
          %1247 = sbr.rel (%p1245) target = $region125
        $region124: #{tpu_custom_call.1} parent=108 // pred_region
          %v1248 = vld [vmem:[#allocation2] sm:$0xff]
          %v1249 = vld [vmem:[#allocation2 + $0x8] sm:$0xff]
          %v1250 = vld [vmem:[#allocation2 + $0x10] sm:$0xff]
          %v1251 = vld [vmem:[#allocation2 + $0x18] sm:$0xff]
          %v1252 = vld [vmem:[#allocation2 + $0x20] sm:$0xff]
          %v1253 = vld [vmem:[#allocation2 + $0x28] sm:$0xff]
          %v1254 = vld [vmem:[#allocation2 + $0x30] sm:$0xff]
          %v1255 = vld [vmem:[#allocation2 + $0x38] sm:$0xff]
          %v1256 = vld [vmem:[#allocation3] sm:$0xff]
          %v1257 = vld [vmem:[#allocation3 + $0x8] sm:$0xff]
          %v1258 = vld [vmem:[#allocation3 + $0x10] sm:$0xff]
          %v1259 = vld [vmem:[#allocation3 + $0x18] sm:$0xff]
          %v1260 = vld [vmem:[#allocation3 + $0x20] sm:$0xff]
          %v1261 = vld [vmem:[#allocation3 + $0x28] sm:$0xff]
          %v1262 = vld [vmem:[#allocation3 + $0x30] sm:$0xff]
          %v1263 = vld [vmem:[#allocation3 + $0x38] sm:$0xff]
          %v1264 = vadd.f32 %v1248, %v1256
          %v1265 = vadd.f32 %v1249, %v1257
          %v1266 = vadd.f32 %v1250, %v1258
          %v1267 = vadd.f32 %v1251, %v1259
          %v1268 = vadd.f32 %v1252, %v1260
          %v1269 = vadd.f32 %v1253, %v1261
          %v1270 = vadd.f32 %v1254, %v1262
          %v1271 = vadd.f32 %v1255, %v1263
          %v1272 = vpack.c.bf16 %v1265, %v1264
          %v1273 = vpack.c.bf16 %v1267, %v1266
          %v1274 = vpack.c.bf16 %v1269, %v1268
          %v1275 = vpack.c.bf16 %v1271, %v1270
          %v1276 = vld [vmem:[%s608] sm:$0xf]
          %v1277 = vld [vmem:[%s608 + $0x4] sm:$0xf]
          %v1278 = vld [vmem:[%s608 + $0x8] sm:$0xf]
          %v1279 = vld [vmem:[%s608 + $0xc] sm:$0xf]
          %v1280 = vld [vmem:[%s611] sm:$0x1]
          %v1282 = vlaneseq
          %v1283 = vshrl.u32 %v1282, 7
          %v1284 = vsub.s32 0, %v1283
          %v1285 = vrot.slane %v1280, %v1284
          %v1291 = vunpack.c.l.b16 %v1276
          %v1292 = vunpack.c.l.b16 %v1277
          %v1293 = vunpack.c.l.b16 %v1278
          %v1294 = vunpack.c.l.b16 %v1279
          %v1295 = vpack.c.b16 %v1292, %v1291
          %v1296 = vpack.c.b16 %v1294, %v1293
          %v1300 = vsel %vm1235, %v1272, 0
          %v1303 = vsel %vm1235, %v1273, 0
          %v1306 = vsel %vm1235, %v1274, 0
          %v1309 = vsel %vm1235, %v1275, 0
          %1311 = vmatprep.subr.bf16.mxu0 0
          %1312 = vmatpush1.bf16.msra.mxu0 %v1295
          %1313 = vmatprep.subr.bf16.mxu0 0
          %1314 = vmatpush1.bf16.msra.mxu0 %v1296
          %1315 = vmatprep.subr.bf16.mxu0 0
          %1316 = vmatpush1.bf16.msra.mxu0 0
          %1317 = vmatprep.subr.bf16.mxu0 0
          %1318 = vmatpush1.bf16.msra.mxu0 0
          %1319 = vmatprep.subr.bf16.mxu0 0
          %1320 = vmatpush1.bf16.msra.mxu0 0
          %1321 = vmatprep.subr.bf16.mxu0 0
          %1322 = vmatpush1.bf16.msra.mxu0 0
          %1323 = vmatprep.subr.bf16.mxu0 0
          %1324 = vmatpush1.bf16.msra.mxu0 0
          %1325 = vmatprep.subr.bf16.mxu0 0
          %1326 = vmatpush1.bf16.msra.mxu0 0
          %1327 = vmatprep.subr.bf16.mxu0 0
          %1328 = vmatpush1.bf16.msra.mxu0 0
          %1329 = vmatprep.subr.bf16.mxu0 0
          %1330 = vmatpush1.bf16.msra.mxu0 0
          %1331 = vmatprep.subr.bf16.mxu0 0
          %1332 = vmatpush1.bf16.msra.mxu0 0
          %1333 = vmatprep.subr.bf16.mxu0 0
          %1334 = vmatpush1.bf16.msra.mxu0 0
          %1335 = vmatprep.subr.bf16.mxu0 0
          %1336 = vmatpush1.bf16.msra.mxu0 0
          %1337 = vmatprep.subr.bf16.mxu0 0
          %1338 = vmatpush1.bf16.msra.mxu0 0
          %1339 = vmatprep.subr.bf16.mxu0 0
          %1340 = vmatpush1.bf16.msra.mxu0 0
          %1341 = vmatprep.subr.bf16.mxu0 0
          %1342 = vmatpush1.bf16.msra.mxu0 0
          %1343 = vmatprep.mubr.bf16.mxu0 0
          %1344 = vmatmul.mubr.bf16.gmra.mrb[0].mxu0 %v1300
          %v1345 = vpop.f32.mrb[0].mxu0
          %v1346 = vadd.f32 %v1285, %v1345
          %v1347 = vpop.f32.mrb[0].mxu0
          %v1348 = vpop.f32.mrb[0].mxu0
          %v1349 = vadd.f32 %v1285, %v1348
          %v1350 = vpop.f32.mrb[0].mxu0
          %1351 = vmatprep.mubr.bf16.mxu0 0
          %1352 = vmatmul.mubr.bf16.gmra.mrb[0].mxu0 %v1303
          %v1353 = vpop.f32.mrb[0].mxu0
          %v1354 = vadd.f32 %v1285, %v1353
          %v1355 = vpop.f32.mrb[0].mxu0
          %v1356 = vpop.f32.mrb[0].mxu0
          %v1357 = vadd.f32 %v1285, %v1356
          %v1358 = vpop.f32.mrb[0].mxu0
          %1359 = vmatprep.mubr.bf16.mxu0 0
          %1360 = vmatmul.mubr.bf16.gmra.mrb[0].mxu0 %v1306
          %v1361 = vpop.f32.mrb[0].mxu0
          %v1362 = vadd.f32 %v1285, %v1361
          %v1363 = vpop.f32.mrb[0].mxu0
          %v1364 = vpop.f32.mrb[0].mxu0
          %v1365 = vadd.f32 %v1285, %v1364
          %v1366 = vpop.f32.mrb[0].mxu0
          %1367 = vmatprep.mubr.bf16.mxu0 0
          %1368 = vmatmul.mubr.bf16.gmra.mrb[0].mxu0 %v1309
          %v1369 = vpop.f32.mrb[0].mxu0
          %v1370 = vadd.f32 %v1285, %v1369
          %v1371 = vpop.f32.mrb[0].mxu0
          %v1372 = vpop.f32.mrb[0].mxu0
          %v1373 = vadd.f32 %v1285, %v1372
          %v1374 = vpop.f32.mrb[0].mxu0
          %1375 = vdwg.mxu0
          %v1376 = vmax.f32 %v1346, 0.0
          %v1377 = vmax.f32 %v1349, 0.0
          %v1378 = vmax.f32 %v1354, 0.0
          %v1379 = vmax.f32 %v1357, 0.0
          %v1380 = vmax.f32 %v1362, 0.0
          %v1381 = vmax.f32 %v1365, 0.0
          %v1382 = vmax.f32 %v1370, 0.0
          %v1383 = vmax.f32 %v1373, 0.0
          %v1384 = vpack.c.bf16 %v1377, %v1376
          %v1385 = vpack.c.bf16 %v1379, %v1378
          %v1386 = vpack.c.bf16 %v1381, %v1380
          %v1387 = vpack.c.bf16 %v1383, %v1382
          %v1388 = vld [vmem:[%s616] sm:$0xf]
          %v1389 = vld [vmem:[%s616 + $0x4] sm:$0xf]
          %v1390 = vld [vmem:[%s616 + $0x8] sm:$0xf]
          %v1391 = vld [vmem:[%s616 + $0xc] sm:$0xf]
          %v1392 = vld [vmem:[%s619] sm:$0x1]
          %v1394 = vlaneseq
          %v1395 = vshrl.u32 %v1394, 7
          %v1396 = vsub.s32 0, %v1395
          %v1397 = vrot.slane %v1392, %v1396
          %v1403 = vunpack.c.l.b16 %v1388
          %v1404 = vunpack.c.l.b16 %v1389
          %v1405 = vunpack.c.l.b16 %v1390
          %v1406 = vunpack.c.l.b16 %v1391
          %v1407 = vpack.c.b16 %v1404, %v1403
          %v1408 = vpack.c.b16 %v1406, %v1405
          %v1412 = vsel %vm1235, %v1384, 0
          %v1415 = vsel %vm1235, %v1385, 0
          %v1418 = vsel %vm1235, %v1386, 0
          %v1421 = vsel %vm1235, %v1387, 0
          %1423 = vmatprep.subr.bf16.mxu0 0
          %1424 = vmatpush1.bf16.msra.mxu0 %v1407
          %1425 = vmatprep.subr.bf16.mxu0 0
          %1426 = vmatpush1.bf16.msra.mxu0 %v1408
          %1427 = vmatprep.subr.bf16.mxu0 0
          %1428 = vmatpush1.bf16.msra.mxu0 0
          %1429 = vmatprep.subr.bf16.mxu0 0
          %1430 = vmatpush1.bf16.msra.mxu0 0
          %1431 = vmatprep.subr.bf16.mxu0 0
          %1432 = vmatpush1.bf16.msra.mxu0 0
          %1433 = vmatprep.subr.bf16.mxu0 0
          %1434 = vmatpush1.bf16.msra.mxu0 0
          %1435 = vmatprep.subr.bf16.mxu0 0
          %1436 = vmatpush1.bf16.msra.mxu0 0
          %1437 = vmatprep.subr.bf16.mxu0 0
          %1438 = vmatpush1.bf16.msra.mxu0 0
          %1439 = vmatprep.subr.bf16.mxu0 0
          %1440 = vmatpush1.bf16.msra.mxu0 0
          %1441 = vmatprep.subr.bf16.mxu0 0
          %1442 = vmatpush1.bf16.msra.mxu0 0
          %1443 = vmatprep.subr.bf16.mxu0 0
          %1444 = vmatpush1.bf16.msra.mxu0 0
          %1445 = vmatprep.subr.bf16.mxu0 0
          %1446 = vmatpush1.bf16.msra.mxu0 0
          %1447 = vmatprep.subr.bf16.mxu0 0
          %1448 = vmatpush1.bf16.msra.mxu0 0
          %1449 = vmatprep.subr.bf16.mxu0 0
          %1450 = vmatpush1.bf16.msra.mxu0 0
          %1451 = vmatprep.subr.bf16.mxu0 0
          %1452 = vmatpush1.bf16.msra.mxu0 0
          %1453 = vmatprep.subr.bf16.mxu0 0
          %1454 = vmatpush1.bf16.msra.mxu0 0
          %1455 = vmatprep.mubr.bf16.mxu0 0
          %1456 = vmatmul.mubr.bf16.gmra.mrb[0].mxu0 %v1412
          %v1457 = vpop.f32.mrb[0].mxu0
          %v1458 = vadd.f32 %v1397, %v1457
          %v1459 = vpop.f32.mrb[0].mxu0
          %v1460 = vpop.f32.mrb[0].mxu0
          %v1461 = vadd.f32 %v1397, %v1460
          %v1462 = vpop.f32.mrb[0].mxu0
          %1463 = vmatprep.mubr.bf16.mxu0 0
          %1464 = vmatmul.mubr.bf16.gmra.mrb[0].mxu0 %v1415
          %v1465 = vpop.f32.mrb[0].mxu0
          %v1466 = vadd.f32 %v1397, %v1465
          %v1467 = vpop.f32.mrb[0].mxu0
          %v1468 = vpop.f32.mrb[0].mxu0
          %v1469 = vadd.f32 %v1397, %v1468
          %v1470 = vpop.f32.mrb[0].mxu0
          %1471 = vmatprep.mubr.bf16.mxu0 0
          %1472 = vmatmul.mubr.bf16.gmra.mrb[0].mxu0 %v1418
          %v1473 = vpop.f32.mrb[0].mxu0
          %v1474 = vadd.f32 %v1397, %v1473
          %v1475 = vpop.f32.mrb[0].mxu0
          %v1476 = vpop.f32.mrb[0].mxu0
          %v1477 = vadd.f32 %v1397, %v1476
          %v1478 = vpop.f32.mrb[0].mxu0
          %1479 = vmatprep.mubr.bf16.mxu0 0
          %1480 = vmatmul.mubr.bf16.gmra.mrb[0].mxu0 %v1421
          %v1481 = vpop.f32.mrb[0].mxu0
          %v1482 = vadd.f32 %v1397, %v1481
          %v1483 = vpop.f32.mrb[0].mxu0
          %v1484 = vpop.f32.mrb[0].mxu0
          %v1485 = vadd.f32 %v1397, %v1484
          %v1486 = vpop.f32.mrb[0].mxu0
          %1487 = vdwg.mxu0
          %v1488 = vmax.f32 %v1458, 0.0
          %v1489 = vmax.f32 %v1461, 0.0
          %v1490 = vmax.f32 %v1466, 0.0
          %v1491 = vmax.f32 %v1469, 0.0
          %v1492 = vmax.f32 %v1474, 0.0
          %v1493 = vmax.f32 %v1477, 0.0
          %v1494 = vmax.f32 %v1482, 0.0
          %v1495 = vmax.f32 %v1485, 0.0
          %1496 = vst.msk [vmem:[#allocation2] sm:$0xff] %vm1235, %v1488
          %1497 = vst.msk [vmem:[#allocation2 + $0x8] sm:$0xff] %vm1235, %v1489
          %1498 = vst.msk [vmem:[#allocation2 + $0x10] sm:$0xff] %vm1235, %v1490
          %1499 = vst.msk [vmem:[#allocation2 + $0x18] sm:$0xff] %vm1235, %v1491
          %1500 = vst.msk [vmem:[#allocation2 + $0x20] sm:$0xff] %vm1235, %v1492
          %1501 = vst.msk [vmem:[#allocation2 + $0x28] sm:$0xff] %vm1235, %v1493
          %1502 = vst.msk [vmem:[#allocation2 + $0x30] sm:$0xff] %vm1235, %v1494
          %1503 = vst.msk [vmem:[#allocation2 + $0x38] sm:$0xff] %vm1235, %v1495
        $region125: #{tpu_custom_call.1} parent=108 // pred_fallthru
          _
        %p1504 = scmp.eq.s32.totalorder %s29, 1
        %p1505 = pnand %p1504, %p1244
        %p1506 = pneg %p1505
        // Predicated region
        $region126: #{tpu_custom_call.1} parent=108 // pred_check
          _
        $region127: #{tpu_custom_call.1} parent=108 // pred_check_branch
          %1508 = sbr.rel (%p1505) target = $region129
        $region128: #{tpu_custom_call.1} parent=108 // pred_region
          %v1509 = vld [vmem:[%s1] sm:$0x1]
          %v1510 = vld [vmem:[#allocation2] sm:$0xff]
          %v1511 = vld [vmem:[#allocation2 + $0x8] sm:$0xff]
          %v1512 = vld [vmem:[#allocation2 + $0x10] sm:$0xff]
          %v1513 = vld [vmem:[#allocation2 + $0x18] sm:$0xff]
          %v1514 = vld [vmem:[#allocation2 + $0x20] sm:$0xff]
          %v1515 = vld [vmem:[#allocation2 + $0x28] sm:$0xff]
          %v1516 = vld [vmem:[#allocation2 + $0x30] sm:$0xff]
          %v1517 = vld [vmem:[#allocation2 + $0x38] sm:$0xff]
          %v1518 = vpack.c.bf16 %v1511, %v1510
          %v1519 = vpack.c.bf16 %v1513, %v1512
          %v1520 = vpack.c.bf16 %v1515, %v1514
          %v1521 = vpack.c.bf16 %v1517, %v1516
          %v1523 = vsel %vm976, %v1509, 0
          %1525 = vmatprep.subr.bf16.mxu0 0
          %1526 = vmatpush1.bf16.msra.mxu0 %v1518
          %1527 = vmatprep.subr.bf16.mxu0 0
          %1528 = vmatpush1.bf16.msra.mxu0 %v1519
          %1529 = vmatprep.subr.bf16.mxu0 0
          %1530 = vmatpush1.bf16.msra.mxu0 %v1520
          %1531 = vmatprep.subr.bf16.mxu0 0
          %1532 = vmatpush1.bf16.msra.mxu0 %v1521
          %1533 = vmatprep.subr.bf16.mxu0 0
          %1534 = vmatpush1.bf16.msra.mxu0 0
          %1535 = vmatprep.subr.bf16.mxu0 0
          %1536 = vmatpush1.bf16.msra.mxu0 0
          %1537 = vmatprep.subr.bf16.mxu0 0
          %1538 = vmatpush1.bf16.msra.mxu0 0
          %1539 = vmatprep.subr.bf16.mxu0 0
          %1540 = vmatpush1.bf16.msra.mxu0 0
          %1541 = vmatprep.subr.bf16.mxu0 0
          %1542 = vmatpush1.bf16.msra.mxu0 0
          %1543 = vmatprep.subr.bf16.mxu0 0
          %1544 = vmatpush1.bf16.msra.mxu0 0
          %1545 = vmatprep.subr.bf16.mxu0 0
          %1546 = vmatpush1.bf16.msra.mxu0 0
          %1547 = vmatprep.subr.bf16.mxu0 0
          %1548 = vmatpush1.bf16.msra.mxu0 0
          %1549 = vmatprep.subr.bf16.mxu0 0
          %1550 = vmatpush1.bf16.msra.mxu0 0
          %1551 = vmatprep.subr.bf16.mxu0 0
          %1552 = vmatpush1.bf16.msra.mxu0 0
          %1553 = vmatprep.subr.bf16.mxu0 0
          %1554 = vmatpush1.bf16.msra.mxu0 0
          %1555 = vmatprep.subr.bf16.mxu0 0
          %1556 = vmatpush1.bf16.msra.mxu0 0
          %1557 = vmatprep.mubr.bf16.mxu0 0
          %1558 = vmatmul.mubr.bf16.gmra.mrb[0].mxu0 %v1523
          %v1559 = vpop.f32.mrb[0].mxu0
          %v1560 = vadd.f32 0.0, %v1559
          %v1561 = vpop.f32.mrb[0].mxu0
          %v1562 = vpop.f32.mrb[0].mxu0
          %v1563 = vpop.f32.mrb[0].mxu0
          %1564 = vdwg.mxu0
          %vm1565 = vcmask 254976
          %1566 = vst.msk [vmem:[#allocation5] sm:$0x3] %vm1565, %v1560
        $region129: #{tpu_custom_call.1} parent=108 // pred_fallthru
          _
        // Predicated region
        $region130: #{tpu_custom_call.1} parent=108 // pred_check
          %p1567 = pneg %p358
        $region131: #{tpu_custom_call.1} parent=108 // pred_check_branch
          %1569 = sbr.rel (%p1567) target = $region133
        $region132: #{tpu_custom_call.1} parent=108 // pred_region
          %s1571 = ssub.s32 32, 32
          %1572 = vsyncadd [#allocation6], %s1571
          %s1574 = sshll.u32 [#allocation5], 4
          %s1575 = int_to_ptr.vmem [resolvable:$true] %s1574
          %1577 = dma.vmem_to_hbm [thread:$0]  %s1575, 32, %s13, [#allocation6]
        $region133: #{tpu_custom_call.1} parent=108 // pred_fallthru
          _
        // Predicated region
        $region134: #{tpu_custom_call.1} parent=108 // pred_check
          %p1578 = pneg %p358
        $region135: #{tpu_custom_call.1} parent=108 // pred_check_branch
          %1580 = sbr.rel (%p1578) target = $region137
        $region136: #{tpu_custom_call.1} parent=108 // pred_region
          %1581 = dma.done [#allocation6], 32
        $region137: #{tpu_custom_call.1} parent=108 // pred_fallthru
          _
      $region109: #{tpu_custom_call.1} parent=5 // pred_fallthru
        _
      %p1582 = scmp.le.s32.totalorder 2, %s20
      // Predicated region
      $region138: #{tpu_custom_call.1} parent=5 // pred_check
        %p1583 = pneg %p1582
      $region139: #{tpu_custom_call.1} parent=5 // pred_check_branch
        %1585 = sbr.rel (%p1583) target = $region141
      $region140: #{tpu_custom_call.1} parent=5 // pred_region
        %s1586 = ssub.s32 %s20, 2
      $region141: #{tpu_custom_call.1} parent=5 // pred_fallthru
        _
    $region6: #{tpu_custom_call.1} parent=1 // loop_footer
      %s24 = sadd.s32 1, %s20
    $region7: #{tpu_custom_call.1} parent=1 // loop_footer_branch
      %19 = sbr.rel target = $region3
    $region8: #{tpu_custom_call.1} parent=1 // loop_exit
      _
    %1587 = vsyncpa [#allocation6], 1
    %s1588 = scalar_lea.sflag [#allocation6], 1
    %1589 = vsyncpa %s1588, 1

</llo_original>
